<compile_context>
chip_gen: v6e
topology: v6e:2x2x1
jax: 0.10.0
libtpu: 0.0.40
codegen_flags: <defaults>
</compile_context>

<pallas_src>
import math

import jax
import jax.numpy as jnp
from jax.experimental import pallas as pl
from jax.experimental.pallas import tpu as pltpu

# -------------------- problem sizes (small, consistent with the module) -----
B = 2          # batch
S = 8          # sequence length
E = 32         # embed_dim
H = 4          # attention_heads
D = E // H     # head dim


def mha_kernel(x_ref, w_in_ref, bias_ref, w_out_ref, o_ref):
    # x_ref: (B*S, E) — whole batch resident in VMEM for one grid-less
    # invocation; weights/bias loaded once, ~20 KiB total.
    x2d = x_ref[...]                                            # [B*S, E]

    # in_proj for the whole batch in one MXU pass: [B*S, 3E]
    proj = jnp.dot(x2d, w_in_ref[...], preferred_element_type=jnp.float32)
    proj = proj + bias_ref[:, :3 * E]                           # b_in slice

    # Column layout matches torch split_heads(proj, 3H) + split(H, dim=1):
    #   query head h -> columns [h*D      : (h+1)*D]
    #   key   head h -> columns [E + h*D  : E + (h+1)*D]
    #   value head h -> columns [2E + h*D : 2E + (h+1)*D]
    # Assemble each of q/k/v as a single head-major batch (H*B, S, D) so the
    # two attention einsums below are each one batched dispatch.
    def gather_heads(col0):
        return jnp.concatenate(
            [proj[:, col0 + h * D: col0 + (h + 1) * D].reshape(B, S, D)
             for h in range(H)],
            axis=0)                                             # [H*B, S, D]

    q = gather_heads(0)
    k = gather_heads(E)
    v = gather_heads(2 * E)

    scale = 1.0 / math.sqrt(D)
    s = jnp.einsum('bqd,bkd->bqk', q, k,
                   preferred_element_type=jnp.float32) * scale  # [H*B, S, S]
    s = s - jnp.max(s, axis=-1, keepdims=True)
    p = jnp.exp(s)
    # Unnormalized p@v first; exact row-sum division afterwards (overlaps the
    # MXU push, saves one full [*,S,S] multiply, and keeps full f32 accuracy).
    o_un = jnp.einsum('bqk,bkd->bqd', p, v,
                      preferred_element_type=jnp.float32)       # [H*B, S, D]
    o = o_un / jnp.sum(p, axis=-1, keepdims=True)

    # combine_heads without a VMEM scratch: slice heads off the leading dim
    # and lane-concatenate straight into the (B*S, E) slab, all in vregs.
    combined = jnp.concatenate(
        [o[h * B:(h + 1) * B].reshape(B * S, D) for h in range(H)],
        axis=-1)                                                # [B*S, E]

    # out_proj for the whole batch in one MXU pass.
    out = jnp.dot(combined, w_out_ref[...],
                  preferred_element_type=jnp.float32)
    out = out + bias_ref[:, 3 * E:]                             # b_out slice
    o_ref[...] = out.astype(o_ref.dtype)


def multi_head_attention(x, w_in, b_in, w_out, b_out):
    """x: [B, S, E] float32; weights pre-transposed to [in_features, out_features]."""
    x2d = x.reshape(B * S, E)               # wrapper-side layout change (free in XLA)
    bias = jnp.concatenate([b_in, b_out], axis=-1)   # (1, 4E) = (1, 128): one DMA
    out2d = pl.pallas_call(
        mha_kernel,
        out_shape=jax.ShapeDtypeStruct((B * S, E), x.dtype),
        in_specs=[
            pl.BlockSpec(memory_space=pltpu.MemorySpace.VMEM),   # x  (whole array)
            pl.BlockSpec(memory_space=pltpu.MemorySpace.VMEM),   # W_in
            pl.BlockSpec(memory_space=pltpu.MemorySpace.VMEM),   # bias (b_in|b_out)
            pl.BlockSpec(memory_space=pltpu.MemorySpace.VMEM),   # W_out
        ],
        out_specs=pl.BlockSpec(memory_space=pltpu.MemorySpace.VMEM),
    )(x2d, w_in, bias, w_out)
    return out2d.reshape(B, S, E)


# -------------------- pure-JAX reference (mirrors the torch code) -----------
def reference(x, w_in, b_in, w_out, b_out):
    proj = x @ w_in + b_in[0]                                    # [B, S, 3E]
    proj = proj.reshape(B, S, 3 * H, D).transpose(0, 2, 1, 3)    # [B, 3H, S, D]
    q, k, v = proj[:, :H], proj[:, H:2 * H], proj[:, 2 * H:]
    s = jnp.einsum('bhqd,bhkd->bhqk', q, k) / math.sqrt(D)
    p = jax.nn.softmax(s, axis=-1)
    o = jnp.einsum('bhqk,bhkd->bhqd', p, v)                      # [B, H, S, D]
    o = o.transpose(0, 2, 1, 3).reshape(B, S, E)                 # combine_heads
    return o @ w_out + b_out[0]


if __name__ == "__main__":
    key = jax.random.PRNGKey(0)
    kx, k1, k2, k3, k4 = jax.random.split(key, 5)

    x = jax.random.normal(kx, (B, S, E), dtype=jnp.float32)

    # Deterministic parameter init (torch Linear-like uniform bound), stored
    # pre-transposed as [in_features, out_features].
    bound_in = 1.0 / math.sqrt(E)
    w_in = jax.random.uniform(k1, (E, 3 * E), jnp.float32, -bound_in, bound_in)
    b_in = jax.random.uniform(k2, (1, 3 * E), jnp.float32, -bound_in, bound_in)
    w_out = jax.random.uniform(k3, (E, E), jnp.float32, -bound_in, bound_in)
    b_out = jax.random.uniform(k4, (1, E), jnp.float32, -bound_in, bound_in)

    out = multi_head_attention(x, w_in, b_in, w_out, b_out)
    out = jax.block_until_ready(out)

    ref = reference(x, w_in, b_in, w_out, b_out)
    assert out.shape == (B, S, E)
    # Exact softmax division restored -> tight tolerance.
    assert jnp.allclose(out, ref, atol=1e-4, rtol=1e-4), "mismatch vs reference"

    print("KERNEL_OK")
</pallas_src>

<mosaic_0001>
module attributes {stable_mosaic.version = 11 : i64} {
  func.func @mha_kernel(%arg0: memref<16x32xf32, #tpu.memory_space<vmem>>, %arg1: memref<32x96xf32, #tpu.memory_space<vmem>>, %arg2: memref<1x128xf32, #tpu.memory_space<vmem>>, %arg3: memref<32x32xf32, #tpu.memory_space<vmem>>, %arg4: memref<16x32xf32, #tpu.memory_space<vmem>>) attributes {dimension_semantics = [], scalar_prefetch = 0 : i64, scratch_operands = 0 : i64, tpu.core_type = #tpu.core_type<tc>} {
    %c0 = arith.constant 0 : index
    %c0_0 = arith.constant 0 : index
    %0 = vector.load %arg0[%c0, %c0_0] : memref<16x32xf32, #tpu.memory_space<vmem>>, vector<16x32xf32>
    %c0_1 = arith.constant 0 : index
    %c0_2 = arith.constant 0 : index
    %1 = vector.load %arg1[%c0_1, %c0_2] : memref<32x96xf32, #tpu.memory_space<vmem>>, vector<32x96xf32>
    %cst = arith.constant dense<0.000000e+00> : vector<16x96xf32>
    %2 = tpu.matmul %0, %1, %cst {dimension_numbers = #tpu.dot_dimension_numbers<[1], [0], [0], [1], [0, 0, 1, 1], [], []>} : vector<16x32xf32>, vector<32x96xf32>, vector<16x96xf32> -> vector<16x96xf32>
    %c0_3 = arith.constant 0 : index
    %c0_4 = arith.constant 0 : index
    %3 = vector.load %arg2[%c0_3, %c0_4] : memref<1x128xf32, #tpu.memory_space<vmem>>, vector<1x96xf32>
    %4 = vector.broadcast %3 : vector<1x96xf32> to vector<16x96xf32>
    %5 = arith.addf %2, %4 : vector<16x96xf32>
    %6 = vector.extract_strided_slice %5 {offsets = [0, 0], sizes = [16, 8], strides = [1, 1]} : vector<16x96xf32> to vector<16x8xf32>
    %7 = vector.shape_cast %6 : vector<16x8xf32> to vector<2x8x8xf32>
    %8 = vector.extract_strided_slice %5 {offsets = [0, 8], sizes = [16, 8], strides = [1, 1]} : vector<16x96xf32> to vector<16x8xf32>
    %9 = vector.shape_cast %8 : vector<16x8xf32> to vector<2x8x8xf32>
    %10 = vector.extract_strided_slice %5 {offsets = [0, 16], sizes = [16, 8], strides = [1, 1]} : vector<16x96xf32> to vector<16x8xf32>
    %11 = vector.shape_cast %10 : vector<16x8xf32> to vector<2x8x8xf32>
    %12 = vector.extract_strided_slice %5 {offsets = [0, 24], sizes = [16, 8], strides = [1, 1]} : vector<16x96xf32> to vector<16x8xf32>
    %13 = vector.shape_cast %12 : vector<16x8xf32> to vector<2x8x8xf32>
    %14 = tpu.concatenate %7, %9, %11, %13 in 0 : vector<2x8x8xf32>, vector<2x8x8xf32>, vector<2x8x8xf32>, vector<2x8x8xf32> -> vector<8x8x8xf32>
    %15 = vector.extract_strided_slice %5 {offsets = [0, 32], sizes = [16, 8], strides = [1, 1]} : vector<16x96xf32> to vector<16x8xf32>
    %16 = vector.shape_cast %15 : vector<16x8xf32> to vector<2x8x8xf32>
    %17 = vector.extract_strided_slice %5 {offsets = [0, 40], sizes = [16, 8], strides = [1, 1]} : vector<16x96xf32> to vector<16x8xf32>
    %18 = vector.shape_cast %17 : vector<16x8xf32> to vector<2x8x8xf32>
    %19 = vector.extract_strided_slice %5 {offsets = [0, 48], sizes = [16, 8], strides = [1, 1]} : vector<16x96xf32> to vector<16x8xf32>
    %20 = vector.shape_cast %19 : vector<16x8xf32> to vector<2x8x8xf32>
    %21 = vector.extract_strided_slice %5 {offsets = [0, 56], sizes = [16, 8], strides = [1, 1]} : vector<16x96xf32> to vector<16x8xf32>
    %22 = vector.shape_cast %21 : vector<16x8xf32> to vector<2x8x8xf32>
    %23 = tpu.concatenate %16, %18, %20, %22 in 0 : vector<2x8x8xf32>, vector<2x8x8xf32>, vector<2x8x8xf32>, vector<2x8x8xf32> -> vector<8x8x8xf32>
    %24 = vector.extract_strided_slice %5 {offsets = [0, 64], sizes = [16, 8], strides = [1, 1]} : vector<16x96xf32> to vector<16x8xf32>
    %25 = vector.shape_cast %24 : vector<16x8xf32> to vector<2x8x8xf32>
    %26 = vector.extract_strided_slice %5 {offsets = [0, 72], sizes = [16, 8], strides = [1, 1]} : vector<16x96xf32> to vector<16x8xf32>
    %27 = vector.shape_cast %26 : vector<16x8xf32> to vector<2x8x8xf32>
    %28 = vector.extract_strided_slice %5 {offsets = [0, 80], sizes = [16, 8], strides = [1, 1]} : vector<16x96xf32> to vector<16x8xf32>
    %29 = vector.shape_cast %28 : vector<16x8xf32> to vector<2x8x8xf32>
    %30 = vector.extract_strided_slice %5 {offsets = [0, 88], sizes = [16, 8], strides = [1, 1]} : vector<16x96xf32> to vector<16x8xf32>
    %31 = vector.shape_cast %30 : vector<16x8xf32> to vector<2x8x8xf32>
    %32 = tpu.concatenate %25, %27, %29, %31 in 0 : vector<2x8x8xf32>, vector<2x8x8xf32>, vector<2x8x8xf32>, vector<2x8x8xf32> -> vector<8x8x8xf32>
    "tpu.trace_start"() <{level = 10 : i32, message = "bqd,bkd->bqk"}> : () -> ()
    %cst_5 = arith.constant dense<0.000000e+00> : vector<8x8x8xf32>
    %33 = tpu.matmul %14, %23, %cst_5 {dimension_numbers = #tpu.dot_dimension_numbers<[2], [2], [1], [1], [0, 0, 0, 1, 1, 1], [0], [0]>} : vector<8x8x8xf32>, vector<8x8x8xf32>, vector<8x8x8xf32> -> vector<8x8x8xf32>
    "tpu.trace_stop"() : () -> ()
    %cst_6 = arith.constant 0.353553385 : f32
    %34 = vector.broadcast %cst_6 : f32 to vector<8x8x8xf32>
    %35 = arith.mulf %33, %34 : vector<8x8x8xf32>
    %cst_7 = arith.constant dense<0xFF800000> : vector<8x8xf32>
    %36 = vector.multi_reduction <maximumf>, %35, %cst_7 [2] : vector<8x8x8xf32> to vector<8x8xf32>
    %37 = vector.shape_cast %36 : vector<8x8xf32> to vector<8x8x1xf32>
    %38 = vector.broadcast %37 : vector<8x8x1xf32> to vector<8x8x8xf32>
    %39 = arith.subf %35, %38 : vector<8x8x8xf32>
    %40 = math.exp %39 : vector<8x8x8xf32>
    "tpu.trace_start"() <{level = 10 : i32, message = "bqk,bkd->bqd"}> : () -> ()
    %cst_8 = arith.constant dense<0.000000e+00> : vector<8x8x8xf32>
    %41 = tpu.matmul %40, %32, %cst_8 {dimension_numbers = #tpu.dot_dimension_numbers<[2], [1], [1], [2], [0, 0, 0, 1, 1, 2], [0], [0]>} : vector<8x8x8xf32>, vector<8x8x8xf32>, vector<8x8x8xf32> -> vector<8x8x8xf32>
    "tpu.trace_stop"() : () -> ()
    %cst_9 = arith.constant dense<0.000000e+00> : vector<8x8xf32>
    %42 = vector.multi_reduction <add>, %40, %cst_9 [2] : vector<8x8x8xf32> to vector<8x8xf32>
    %43 = vector.shape_cast %42 : vector<8x8xf32> to vector<8x8x1xf32>
    %44 = vector.broadcast %43 : vector<8x8x1xf32> to vector<8x8x8xf32>
    %45 = arith.divf %41, %44 : vector<8x8x8xf32>
    %46 = vector.extract_strided_slice %45 {offsets = [0, 0, 0], sizes = [2, 8, 8], strides = [1, 1, 1]} : vector<8x8x8xf32> to vector<2x8x8xf32>
    %47 = vector.shape_cast %46 : vector<2x8x8xf32> to vector<16x8xf32>
    %48 = vector.extract_strided_slice %45 {offsets = [2, 0, 0], sizes = [2, 8, 8], strides = [1, 1, 1]} : vector<8x8x8xf32> to vector<2x8x8xf32>
    %49 = vector.shape_cast %48 : vector<2x8x8xf32> to vector<16x8xf32>
    %50 = vector.extract_strided_slice %45 {offsets = [4, 0, 0], sizes = [2, 8, 8], strides = [1, 1, 1]} : vector<8x8x8xf32> to vector<2x8x8xf32>
    %51 = vector.shape_cast %50 : vector<2x8x8xf32> to vector<16x8xf32>
    %52 = vector.extract_strided_slice %45 {offsets = [6, 0, 0], sizes = [2, 8, 8], strides = [1, 1, 1]} : vector<8x8x8xf32> to vector<2x8x8xf32>
    %53 = vector.shape_cast %52 : vector<2x8x8xf32> to vector<16x8xf32>
    %54 = tpu.concatenate %47, %49, %51, %53 in 1 : vector<16x8xf32>, vector<16x8xf32>, vector<16x8xf32>, vector<16x8xf32> -> vector<16x32xf32>
    %c0_10 = arith.constant 0 : index
    %c0_11 = arith.constant 0 : index
    %55 = vector.load %arg3[%c0_10, %c0_11] : memref<32x32xf32, #tpu.memory_space<vmem>>, vector<32x32xf32>
    %cst_12 = arith.constant dense<0.000000e+00> : vector<16x32xf32>
    %56 = tpu.matmul %54, %55, %cst_12 {dimension_numbers = #tpu.dot_dimension_numbers<[1], [0], [0], [1], [0, 0, 1, 1], [], []>} : vector<16x32xf32>, vector<32x32xf32>, vector<16x32xf32> -> vector<16x32xf32>
    %c0_13 = arith.constant 0 : index
    %c96 = arith.constant 96 : index
    %57 = vector.load %arg2[%c0_13, %c96] : memref<1x128xf32, #tpu.memory_space<vmem>>, vector<1x32xf32>
    %58 = vector.broadcast %57 : vector<1x32xf32> to vector<16x32xf32>
    %59 = arith.addf %56, %58 : vector<16x32xf32>
    %c0_14 = arith.constant 0 : index
    %c0_15 = arith.constant 0 : index
    %60 = vector.load %arg4[%c0_14, %c0_15] : memref<16x32xf32, #tpu.memory_space<vmem>>, vector<16x32xf32>
    tpu.vector_store %arg4[%c0_14, %c0_15], %59 {strides = array<i32>} : memref<16x32xf32, #tpu.memory_space<vmem>>, vector<16x32xf32>,
    return
  }
}

</mosaic_0001>

<llo_original>
// kernel: tpu_custom_call.1
$region0: #{tpu_custom_call.1}
  #allocation0 [shape = 'u32[]', space=smem, size = 0x4, offset = 0x4, fixed_abs, tag = 'smem constant byte address 0x4 - core index']
  #allocation1 [shape = 'u32[144,128]{1,0:T(1,128)}', space=vmem, size = 0x12000, scoped, tag = 'internal scratch']
  %s0 = inlined_call_operand.hbm [shape: f32[16,32], index: 0, kind: input, shape index: {}]
  %s1 = inlined_call_operand.hbm [shape: f32[32,96], index: 1, kind: input, shape index: {}]
  %s2 = inlined_call_operand.vmem [shape: f32[1,128], index: 2, kind: input, shape index: {}]
  %s3 = inlined_call_operand.hbm [shape: f32[32,32], index: 3, kind: input, shape index: {}]
  %s4 = inlined_call_operand.hbm [shape: f32[16,32], index: 4, kind: output, shape index: {}]
  %s5 = sld [smem:[#allocation0]]
  $region38: #{tpu_custom_call.1} parent=0
    _
  %s7 = ssub.s32 1, %s5
  %s8 = scalar_select 0, %s7, %s5
  $region1: #{tpu_custom_call.1} parent=0
    #allocation2 [shape = 'u8[8192]{0}', space=vmem, size = 0x2000, scoped, tag = 'input window, operand 0, single buffered']
    #allocation3 [shape = 's32[1]{0}', space=sflag, size = 0x4, scoped, tag = 'scoped memory for tpu_custom_call.1']
    #allocation4 [shape = 's32[1]{0}', space=sflag, size = 0x4, scoped, tag = 'scoped memory for tpu_custom_call.1']
    #allocation5 [shape = 'u8[16384]{0}', space=vmem, size = 0x4000, scoped, tag = 'input window, operand 1, single buffered']
    #allocation6 [shape = 's32[1]{0}', space=sflag, size = 0x4, scoped, tag = 'scoped memory for tpu_custom_call.1']
    #allocation7 [shape = 'u8[16384]{0}', space=vmem, size = 0x4000, scoped, tag = 'input window, operand 3, single buffered']
    #allocation8 [shape = 'u8[8192]{0}', space=vmem, size = 0x2000, scoped, tag = 'output window, operand 0, single buffered']
    %9 = vsyncpa [#allocation3], 0
    %10 = vsyncpa [#allocation6], 0
    %11 = vsyncpa [#allocation4], 0
    // Predicated region
    $region2: #{tpu_custom_call.1} parent=1 // pred_check
      _
    $region3: #{tpu_custom_call.1} parent=1 // pred_check_branch
      %13 = sbr.rel (0) target = $region5
    $region4: #{tpu_custom_call.1} parent=1 // pred_region
      %s15 = ssub.s32 256, 256
      %16 = vsyncadd [#allocation3], %s15
      %s17 = sshll.u32 [#allocation2], 4
      %s18 = int_to_ptr.vmem [resolvable:$true] %s17
      %23 = dma.hbm_to_vmem [thread:$0]  %s0, 256, %s18, [#allocation3], 128, 128, 8
    $region5: #{tpu_custom_call.1} parent=1 // pred_fallthru
      _
    // Predicated region
    $region6: #{tpu_custom_call.1} parent=1 // pred_check
      _
    $region7: #{tpu_custom_call.1} parent=1 // pred_check_branch
      %25 = sbr.rel (0) target = $region9
    $region8: #{tpu_custom_call.1} parent=1 // pred_region
      %s27 = ssub.s32 512, 512
      %28 = vsyncadd [#allocation6], %s27
      %s29 = sshll.u32 [#allocation5], 4
      %s30 = int_to_ptr.vmem [resolvable:$true] %s29
      %35 = dma.hbm_to_vmem [thread:$0]  %s1, 512, %s30, [#allocation6], 128, 128, 8
    $region9: #{tpu_custom_call.1} parent=1 // pred_fallthru
      _
    // Predicated region
    $region10: #{tpu_custom_call.1} parent=1 // pred_check
      _
    $region11: #{tpu_custom_call.1} parent=1 // pred_check_branch
      %37 = sbr.rel (0) target = $region13
    $region12: #{tpu_custom_call.1} parent=1 // pred_region
      _
    $region13: #{tpu_custom_call.1} parent=1 // pred_fallthru
      _
    // Predicated region
    $region14: #{tpu_custom_call.1} parent=1 // pred_check
      _
    $region15: #{tpu_custom_call.1} parent=1 // pred_check_branch
      %39 = sbr.rel (0) target = $region17
    $region16: #{tpu_custom_call.1} parent=1 // pred_region
      %s41 = ssub.s32 512, 512
      %42 = vsyncadd [#allocation6], %s41
      %s43 = sshll.u32 [#allocation7], 4
      %s44 = int_to_ptr.vmem [resolvable:$true] %s43
      %49 = dma.hbm_to_vmem [thread:$0]  %s3, 512, %s44, [#allocation6], 128, 128, 8
    $region17: #{tpu_custom_call.1} parent=1 // pred_fallthru
      _
    // Predicated region
    $region18: #{tpu_custom_call.1} parent=1 // pred_check
      _
    $region19: #{tpu_custom_call.1} parent=1 // pred_check_branch
      %51 = sbr.rel (0) target = $region21
    $region20: #{tpu_custom_call.1} parent=1 // pred_region
      %52 = dma.done [#allocation3], 256
    $region21: #{tpu_custom_call.1} parent=1 // pred_fallthru
      _
    // Predicated region
    $region22: #{tpu_custom_call.1} parent=1 // pred_check
      _
    $region23: #{tpu_custom_call.1} parent=1 // pred_check_branch
      %54 = sbr.rel (0) target = $region25
    $region24: #{tpu_custom_call.1} parent=1 // pred_region
      %55 = dma.done [#allocation6], 512
    $region25: #{tpu_custom_call.1} parent=1 // pred_fallthru
      _
    // Predicated region
    $region26: #{tpu_custom_call.1} parent=1 // pred_check
      _
    $region27: #{tpu_custom_call.1} parent=1 // pred_check_branch
      %57 = sbr.rel (0) target = $region29
    $region28: #{tpu_custom_call.1} parent=1 // pred_region
      %58 = dma.done [#allocation6], 512
    $region29: #{tpu_custom_call.1} parent=1 // pred_fallthru
      _
    %v59 = vld [vmem:[#allocation2] sm:$0xff]
    %v60 = vld [vmem:[#allocation2 + $0x8] sm:$0xff]
    %v61 = vld [vmem:[#allocation5] sm:$0xff]
    %v62 = vld [vmem:[#allocation5 + $0x8] sm:$0xff]
    %v63 = vld [vmem:[#allocation5 + $0x10] sm:$0xff]
    %v64 = vld [vmem:[#allocation5 + $0x18] sm:$0xff]
    %v65 = vld [vmem:[%s2] sm:$0x1]
    %v67 = vlaneseq
    %v68 = vshrl.u32 %v67, 7
    %v69 = vsub.s32 0, %v68
    %v70 = vrot.slane %v65, %v69
    %vm72 = vcmask 261120
    %v74 = vsel %vm72, %v59, 0
    %v77 = vsel %vm72, %v60, 0
    %79 = vmatprep.subr.mxu0 0.0
    %80 = vmatpush1.msra.mxu0 0.0
    %81 = vmatprep.subr.mxu0 0.0
    %82 = vmatpush1.msra.mxu0 0.0
    %83 = vmatprep.subr.mxu0 0.0
    %84 = vmatpush1.msra.mxu0 0.0
    %85 = vmatprep.subr.mxu0 0.0
    %86 = vmatpush1.msra.mxu0 0.0
    %87 = vmatprep.subr.mxu0 0.0
    %88 = vmatpush1.msra.mxu0 0.0
    %89 = vmatprep.subr.mxu0 0.0
    %90 = vmatpush1.msra.mxu0 0.0
    %91 = vmatprep.subr.mxu0 0.0
    %92 = vmatpush1.msra.mxu0 0.0
    %93 = vmatprep.subr.mxu0 0.0
    %94 = vmatpush1.msra.mxu0 0.0
    %95 = vmatprep.subr.mxu0 0.0
    %96 = vmatpush1.msra.mxu0 0.0
    %97 = vmatprep.subr.mxu0 0.0
    %98 = vmatpush1.msra.mxu0 0.0
    %99 = vmatprep.subr.mxu0 0.0
    %100 = vmatpush1.msra.mxu0 0.0
    %101 = vmatprep.subr.mxu0 0.0
    %102 = vmatpush1.msra.mxu0 0.0
    %103 = vmatprep.subr.mxu0 0.0
    %104 = vmatpush1.msra.mxu0 %v64
    %105 = vmatprep.subr.mxu0 0.0
    %106 = vmatpush1.msra.mxu0 %v63
    %107 = vmatprep.subr.mxu0 0.0
    %108 = vmatpush1.msra.mxu0 %v62
    %109 = vmatprep.subr.mxu0 0.0
    %110 = vmatpush1.msra.mxu0 %v61
    %111 = vmatprep.subr.mxu0 0.0
    %112 = vmatpush2.msra.mxu0 0.0
    %113 = vmatprep.subr.mxu0 0.0
    %114 = vmatpush2.msra.mxu0 0.0
    %115 = vmatprep.subr.mxu0 0.0
    %116 = vmatpush2.msra.mxu0 0.0
    %117 = vmatprep.subr.mxu0 0.0
    %118 = vmatpush2.msra.mxu0 0.0
    %119 = vmatprep.subr.mxu0 0.0
    %120 = vmatpush2.msra.mxu0 0.0
    %121 = vmatprep.subr.mxu0 0.0
    %122 = vmatpush2.msra.mxu0 0.0
    %123 = vmatprep.subr.mxu0 0.0
    %124 = vmatpush2.msra.mxu0 0.0
    %125 = vmatprep.subr.mxu0 0.0
    %126 = vmatpush2.msra.mxu0 0.0
    %127 = vmatprep.subr.mxu0 0.0
    %128 = vmatpush2.msra.mxu0 0.0
    %129 = vmatprep.subr.mxu0 0.0
    %130 = vmatpush2.msra.mxu0 0.0
    %131 = vmatprep.subr.mxu0 0.0
    %132 = vmatpush2.msra.mxu0 0.0
    %133 = vmatprep.subr.mxu0 0.0
    %134 = vmatpush2.msra.mxu0 0.0
    %135 = vmatprep.subr.mxu0 0.0
    %136 = vmatpush2.msra.mxu0 0.0
    %137 = vmatprep.subr.mxu0 0.0
    %138 = vmatpush2.msra.mxu0 0.0
    %139 = vmatprep.subr.mxu0 0.0
    %140 = vmatpush2.msra.mxu0 0.0
    %141 = vmatprep.subr.mxu0 0.0
    %142 = vmatpush2.msra.mxu0 0.0
    %143 = vmatprep.mubr.f32.mxu0 0.0
    %144 = vmatmul.mubr.f32.gmra.mxu0 %v74
    %v145 = vpop.f32.mrf.mxu0
    %v146 = vadd.f32 %v70, %v145
    %v147 = vpop.f32.mrf.mxu0
    %148 = vmatprep.mubr.f32.mxu0 0.0
    %149 = vmatmul.mubr.f32.gmra.mxu0 %v77
    %v150 = vpop.f32.mrf.mxu0
    %v151 = vadd.f32 %v70, %v150
    %v152 = vpop.f32.mrf.mxu0
    %153 = vdwg.mxu0
    %156 = vrot.lane.b32.xlu0 %v146, 120
    %v157 = vpop.permute.xlu0 %156
    %158 = vrot.lane.b32.xlu0 %v151, 120
    %v159 = vpop.permute.xlu0 %158
    %160 = vrot.lane.b32.xlu0 %v146, 112
    %v161 = vpop.permute.xlu0 %160
    %162 = vrot.lane.b32.xlu0 %v151, 112
    %v163 = vpop.permute.xlu0 %162
    %164 = vrot.lane.b32.xlu0 %v146, 104
    %v165 = vpop.permute.xlu0 %164
    %166 = vrot.lane.b32.xlu0 %v151, 104
    %v167 = vpop.permute.xlu0 %166
    %168 = vrot.lane.b32.xlu0 %v146, 96
    %v169 = vpop.permute.xlu0 %168
    %vm170 = vcmask 64512
    %v171 = vsel %vm170, %v146, 0
    %v173 = vsel %vm170, %v169, 0
    %175 = vmatprep.subr.mxu0 0.0
    %176 = vmatpush1.xpose.msra.mxu0 0.0
    %177 = vmatprep.subr.mxu0 0.0
    %178 = vmatpush1.xpose.msra.mxu0 0.0
    %179 = vmatprep.subr.mxu0 0.0
    %180 = vmatpush1.xpose.msra.mxu0 0.0
    %181 = vmatprep.subr.mxu0 0.0
    %182 = vmatpush1.xpose.msra.mxu0 0.0
    %183 = vmatprep.subr.mxu0 0.0
    %184 = vmatpush1.xpose.msra.mxu0 0.0
    %185 = vmatprep.subr.mxu0 0.0
    %186 = vmatpush1.xpose.msra.mxu0 0.0
    %187 = vmatprep.subr.mxu0 0.0
    %188 = vmatpush1.xpose.msra.mxu0 0.0
    %189 = vmatprep.subr.mxu0 0.0
    %190 = vmatpush1.xpose.msra.mxu0 0.0
    %191 = vmatprep.subr.mxu0 0.0
    %192 = vmatpush1.xpose.msra.mxu0 0.0
    %193 = vmatprep.subr.mxu0 0.0
    %194 = vmatpush1.xpose.msra.mxu0 0.0
    %195 = vmatprep.subr.mxu0 0.0
    %196 = vmatpush1.xpose.msra.mxu0 0.0
    %197 = vmatprep.subr.mxu0 0.0
    %198 = vmatpush1.xpose.msra.mxu0 0.0
    %199 = vmatprep.subr.mxu0 0.0
    %200 = vmatpush1.xpose.msra.mxu0 0.0
    %201 = vmatprep.subr.mxu0 0.0
    %202 = vmatpush1.xpose.msra.mxu0 0.0
    %203 = vmatprep.subr.mxu0 0.0
    %204 = vmatpush1.xpose.msra.mxu0 0.0
    %205 = vmatprep.subr.mxu0 0.0
    %206 = vmatpush1.xpose.msra.mxu0 %v173
    %207 = vmatprep.subr.mxu0 0.0
    %208 = vmatpush2.xpose.msra.mxu0 0.0
    %209 = vmatprep.subr.mxu0 0.0
    %210 = vmatpush2.xpose.msra.mxu0 0.0
    %211 = vmatprep.subr.mxu0 0.0
    %212 = vmatpush2.xpose.msra.mxu0 0.0
    %213 = vmatprep.subr.mxu0 0.0
    %214 = vmatpush2.xpose.msra.mxu0 0.0
    %215 = vmatprep.subr.mxu0 0.0
    %216 = vmatpush2.xpose.msra.mxu0 0.0
    %217 = vmatprep.subr.mxu0 0.0
    %218 = vmatpush2.xpose.msra.mxu0 0.0
    %219 = vmatprep.subr.mxu0 0.0
    %220 = vmatpush2.xpose.msra.mxu0 0.0
    %221 = vmatprep.subr.mxu0 0.0
    %222 = vmatpush2.xpose.msra.mxu0 0.0
    %223 = vmatprep.subr.mxu0 0.0
    %224 = vmatpush2.xpose.msra.mxu0 0.0
    %225 = vmatprep.subr.mxu0 0.0
    %226 = vmatpush2.xpose.msra.mxu0 0.0
    %227 = vmatprep.subr.mxu0 0.0
    %228 = vmatpush2.xpose.msra.mxu0 0.0
    %229 = vmatprep.subr.mxu0 0.0
    %230 = vmatpush2.xpose.msra.mxu0 0.0
    %231 = vmatprep.subr.mxu0 0.0
    %232 = vmatpush2.xpose.msra.mxu0 0.0
    %233 = vmatprep.subr.mxu0 0.0
    %234 = vmatpush2.xpose.msra.mxu0 0.0
    %235 = vmatprep.subr.mxu0 0.0
    %236 = vmatpush2.xpose.msra.mxu0 0.0
    %237 = vmatprep.subr.mxu0 0.0
    %238 = vmatpush2.xpose.msra.mxu0 0.0
    %239 = vmatprep.mubr.f32.mxu0 0.0
    %240 = vmatmul.mubr.f32.gmra.mxu0 %v171
    %v241 = vpop.f32.mrf.mxu0
    %v242 = vadd.f32 0.0, %v241
    %v243 = vpop.f32.mrf.mxu0
    %244 = vdwg.mxu0
    %245 = vrot.lane.b32.xlu0 %v151, 96
    %v246 = vpop.permute.xlu0 %245
    %v247 = vsel %vm170, %v151, 0
    %v249 = vsel %vm170, %v246, 0
    %251 = vmatprep.subr.mxu0 0.0
    %252 = vmatpush1.xpose.msra.mxu0 0.0
    %253 = vmatprep.subr.mxu0 0.0
    %254 = vmatpush1.xpose.msra.mxu0 0.0
    %255 = vmatprep.subr.mxu0 0.0
    %256 = vmatpush1.xpose.msra.mxu0 0.0
    %257 = vmatprep.subr.mxu0 0.0
    %258 = vmatpush1.xpose.msra.mxu0 0.0
    %259 = vmatprep.subr.mxu0 0.0
    %260 = vmatpush1.xpose.msra.mxu0 0.0
    %261 = vmatprep.subr.mxu0 0.0
    %262 = vmatpush1.xpose.msra.mxu0 0.0
    %263 = vmatprep.subr.mxu0 0.0
    %264 = vmatpush1.xpose.msra.mxu0 0.0
    %265 = vmatprep.subr.mxu0 0.0
    %266 = vmatpush1.xpose.msra.mxu0 0.0
    %267 = vmatprep.subr.mxu0 0.0
    %268 = vmatpush1.xpose.msra.mxu0 0.0
    %269 = vmatprep.subr.mxu0 0.0
    %270 = vmatpush1.xpose.msra.mxu0 0.0
    %271 = vmatprep.subr.mxu0 0.0
    %272 = vmatpush1.xpose.msra.mxu0 0.0
    %273 = vmatprep.subr.mxu0 0.0
    %274 = vmatpush1.xpose.msra.mxu0 0.0
    %275 = vmatprep.subr.mxu0 0.0
    %276 = vmatpush1.xpose.msra.mxu0 0.0
    %277 = vmatprep.subr.mxu0 0.0
    %278 = vmatpush1.xpose.msra.mxu0 0.0
    %279 = vmatprep.subr.mxu0 0.0
    %280 = vmatpush1.xpose.msra.mxu0 0.0
    %281 = vmatprep.subr.mxu0 0.0
    %282 = vmatpush1.xpose.msra.mxu0 %v249
    %283 = vmatprep.subr.mxu0 0.0
    %284 = vmatpush2.xpose.msra.mxu0 0.0
    %285 = vmatprep.subr.mxu0 0.0
    %286 = vmatpush2.xpose.msra.mxu0 0.0
    %287 = vmatprep.subr.mxu0 0.0
    %288 = vmatpush2.xpose.msra.mxu0 0.0
    %289 = vmatprep.subr.mxu0 0.0
    %290 = vmatpush2.xpose.msra.mxu0 0.0
    %291 = vmatprep.subr.mxu0 0.0
    %292 = vmatpush2.xpose.msra.mxu0 0.0
    %293 = vmatprep.subr.mxu0 0.0
    %294 = vmatpush2.xpose.msra.mxu0 0.0
    %295 = vmatprep.subr.mxu0 0.0
    %296 = vmatpush2.xpose.msra.mxu0 0.0
    %297 = vmatprep.subr.mxu0 0.0
    %298 = vmatpush2.xpose.msra.mxu0 0.0
    %299 = vmatprep.subr.mxu0 0.0
    %300 = vmatpush2.xpose.msra.mxu0 0.0
    %301 = vmatprep.subr.mxu0 0.0
    %302 = vmatpush2.xpose.msra.mxu0 0.0
    %303 = vmatprep.subr.mxu0 0.0
    %304 = vmatpush2.xpose.msra.mxu0 0.0
    %305 = vmatprep.subr.mxu0 0.0
    %306 = vmatpush2.xpose.msra.mxu0 0.0
    %307 = vmatprep.subr.mxu0 0.0
    %308 = vmatpush2.xpose.msra.mxu0 0.0
    %309 = vmatprep.subr.mxu0 0.0
    %310 = vmatpush2.xpose.msra.mxu0 0.0
    %311 = vmatprep.subr.mxu0 0.0
    %312 = vmatpush2.xpose.msra.mxu0 0.0
    %313 = vmatprep.subr.mxu0 0.0
    %314 = vmatpush2.xpose.msra.mxu0 0.0
    %315 = vmatprep.mubr.f32.mxu0 0.0
    %316 = vmatmul.mubr.f32.gmra.mxu0 %v247
    %v317 = vpop.f32.mrf.mxu0
    %v318 = vadd.f32 0.0, %v317
    %v319 = vpop.f32.mrf.mxu0
    %320 = vdwg.mxu0
    %321 = vrot.lane.b32.xlu0 %v157, 96
    %v322 = vpop.permute.xlu0 %321
    %v323 = vsel %vm170, %v157, 0
    %v325 = vsel %vm170, %v322, 0
    %327 = vmatprep.subr.mxu0 0.0
    %328 = vmatpush1.xpose.msra.mxu0 0.0
    %329 = vmatprep.subr.mxu0 0.0
    %330 = vmatpush1.xpose.msra.mxu0 0.0
    %331 = vmatprep.subr.mxu0 0.0
    %332 = vmatpush1.xpose.msra.mxu0 0.0
    %333 = vmatprep.subr.mxu0 0.0
    %334 = vmatpush1.xpose.msra.mxu0 0.0
    %335 = vmatprep.subr.mxu0 0.0
    %336 = vmatpush1.xpose.msra.mxu0 0.0
    %337 = vmatprep.subr.mxu0 0.0
    %338 = vmatpush1.xpose.msra.mxu0 0.0
    %339 = vmatprep.subr.mxu0 0.0
    %340 = vmatpush1.xpose.msra.mxu0 0.0
    %341 = vmatprep.subr.mxu0 0.0
    %342 = vmatpush1.xpose.msra.mxu0 0.0
    %343 = vmatprep.subr.mxu0 0.0
    %344 = vmatpush1.xpose.msra.mxu0 0.0
    %345 = vmatprep.subr.mxu0 0.0
    %346 = vmatpush1.xpose.msra.mxu0 0.0
    %347 = vmatprep.subr.mxu0 0.0
    %348 = vmatpush1.xpose.msra.mxu0 0.0
    %349 = vmatprep.subr.mxu0 0.0
    %350 = vmatpush1.xpose.msra.mxu0 0.0
    %351 = vmatprep.subr.mxu0 0.0
    %352 = vmatpush1.xpose.msra.mxu0 0.0
    %353 = vmatprep.subr.mxu0 0.0
    %354 = vmatpush1.xpose.msra.mxu0 0.0
    %355 = vmatprep.subr.mxu0 0.0
    %356 = vmatpush1.xpose.msra.mxu0 0.0
    %357 = vmatprep.subr.mxu0 0.0
    %358 = vmatpush1.xpose.msra.mxu0 %v325
    %359 = vmatprep.subr.mxu0 0.0
    %360 = vmatpush2.xpose.msra.mxu0 0.0
    %361 = vmatprep.subr.mxu0 0.0
    %362 = vmatpush2.xpose.msra.mxu0 0.0
    %363 = vmatprep.subr.mxu0 0.0
    %364 = vmatpush2.xpose.msra.mxu0 0.0
    %365 = vmatprep.subr.mxu0 0.0
    %366 = vmatpush2.xpose.msra.mxu0 0.0
    %367 = vmatprep.subr.mxu0 0.0
    %368 = vmatpush2.xpose.msra.mxu0 0.0
    %369 = vmatprep.subr.mxu0 0.0
    %370 = vmatpush2.xpose.msra.mxu0 0.0
    %371 = vmatprep.subr.mxu0 0.0
    %372 = vmatpush2.xpose.msra.mxu0 0.0
    %373 = vmatprep.subr.mxu0 0.0
    %374 = vmatpush2.xpose.msra.mxu0 0.0
    %375 = vmatprep.subr.mxu0 0.0
    %376 = vmatpush2.xpose.msra.mxu0 0.0
    %377 = vmatprep.subr.mxu0 0.0
    %378 = vmatpush2.xpose.msra.mxu0 0.0
    %379 = vmatprep.subr.mxu0 0.0
    %380 = vmatpush2.xpose.msra.mxu0 0.0
    %381 = vmatprep.subr.mxu0 0.0
    %382 = vmatpush2.xpose.msra.mxu0 0.0
    %383 = vmatprep.subr.mxu0 0.0
    %384 = vmatpush2.xpose.msra.mxu0 0.0
    %385 = vmatprep.subr.mxu0 0.0
    %386 = vmatpush2.xpose.msra.mxu0 0.0
    %387 = vmatprep.subr.mxu0 0.0
    %388 = vmatpush2.xpose.msra.mxu0 0.0
    %389 = vmatprep.subr.mxu0 0.0
    %390 = vmatpush2.xpose.msra.mxu0 0.0
    %391 = vmatprep.mubr.f32.mxu0 0.0
    %392 = vmatmul.mubr.f32.gmra.mxu0 %v323
    %v393 = vpop.f32.mrf.mxu0
    %v394 = vadd.f32 0.0, %v393
    %v395 = vpop.f32.mrf.mxu0
    %396 = vdwg.mxu0
    %397 = vrot.lane.b32.xlu0 %v159, 96
    %v398 = vpop.permute.xlu0 %397
    %v399 = vsel %vm170, %v159, 0
    %v401 = vsel %vm170, %v398, 0
    %403 = vmatprep.subr.mxu0 0.0
    %404 = vmatpush1.xpose.msra.mxu0 0.0
    %405 = vmatprep.subr.mxu0 0.0
    %406 = vmatpush1.xpose.msra.mxu0 0.0
    %407 = vmatprep.subr.mxu0 0.0
    %408 = vmatpush1.xpose.msra.mxu0 0.0
    %409 = vmatprep.subr.mxu0 0.0
    %410 = vmatpush1.xpose.msra.mxu0 0.0
    %411 = vmatprep.subr.mxu0 0.0
    %412 = vmatpush1.xpose.msra.mxu0 0.0
    %413 = vmatprep.subr.mxu0 0.0
    %414 = vmatpush1.xpose.msra.mxu0 0.0
    %415 = vmatprep.subr.mxu0 0.0
    %416 = vmatpush1.xpose.msra.mxu0 0.0
    %417 = vmatprep.subr.mxu0 0.0
    %418 = vmatpush1.xpose.msra.mxu0 0.0
    %419 = vmatprep.subr.mxu0 0.0
    %420 = vmatpush1.xpose.msra.mxu0 0.0
    %421 = vmatprep.subr.mxu0 0.0
    %422 = vmatpush1.xpose.msra.mxu0 0.0
    %423 = vmatprep.subr.mxu0 0.0
    %424 = vmatpush1.xpose.msra.mxu0 0.0
    %425 = vmatprep.subr.mxu0 0.0
    %426 = vmatpush1.xpose.msra.mxu0 0.0
    %427 = vmatprep.subr.mxu0 0.0
    %428 = vmatpush1.xpose.msra.mxu0 0.0
    %429 = vmatprep.subr.mxu0 0.0
    %430 = vmatpush1.xpose.msra.mxu0 0.0
    %431 = vmatprep.subr.mxu0 0.0
    %432 = vmatpush1.xpose.msra.mxu0 0.0
    %433 = vmatprep.subr.mxu0 0.0
    %434 = vmatpush1.xpose.msra.mxu0 %v401
    %435 = vmatprep.subr.mxu0 0.0
    %436 = vmatpush2.xpose.msra.mxu0 0.0
    %437 = vmatprep.subr.mxu0 0.0
    %438 = vmatpush2.xpose.msra.mxu0 0.0
    %439 = vmatprep.subr.mxu0 0.0
    %440 = vmatpush2.xpose.msra.mxu0 0.0
    %441 = vmatprep.subr.mxu0 0.0
    %442 = vmatpush2.xpose.msra.mxu0 0.0
    %443 = vmatprep.subr.mxu0 0.0
    %444 = vmatpush2.xpose.msra.mxu0 0.0
    %445 = vmatprep.subr.mxu0 0.0
    %446 = vmatpush2.xpose.msra.mxu0 0.0
    %447 = vmatprep.subr.mxu0 0.0
    %448 = vmatpush2.xpose.msra.mxu0 0.0
    %449 = vmatprep.subr.mxu0 0.0
    %450 = vmatpush2.xpose.msra.mxu0 0.0
    %451 = vmatprep.subr.mxu0 0.0
    %452 = vmatpush2.xpose.msra.mxu0 0.0
    %453 = vmatprep.subr.mxu0 0.0
    %454 = vmatpush2.xpose.msra.mxu0 0.0
    %455 = vmatprep.subr.mxu0 0.0
    %456 = vmatpush2.xpose.msra.mxu0 0.0
    %457 = vmatprep.subr.mxu0 0.0
    %458 = vmatpush2.xpose.msra.mxu0 0.0
    %459 = vmatprep.subr.mxu0 0.0
    %460 = vmatpush2.xpose.msra.mxu0 0.0
    %461 = vmatprep.subr.mxu0 0.0
    %462 = vmatpush2.xpose.msra.mxu0 0.0
    %463 = vmatprep.subr.mxu0 0.0
    %464 = vmatpush2.xpose.msra.mxu0 0.0
    %465 = vmatprep.subr.mxu0 0.0
    %466 = vmatpush2.xpose.msra.mxu0 0.0
    %467 = vmatprep.mubr.f32.mxu0 0.0
    %468 = vmatmul.mubr.f32.gmra.mxu0 %v399
    %v469 = vpop.f32.mrf.mxu0
    %v470 = vadd.f32 0.0, %v469
    %v471 = vpop.f32.mrf.mxu0
    %472 = vdwg.mxu0
    %473 = vrot.lane.b32.xlu0 %v161, 96
    %v474 = vpop.permute.xlu0 %473
    %v475 = vsel %vm170, %v161, 0
    %v477 = vsel %vm170, %v474, 0
    %479 = vmatprep.subr.mxu0 0.0
    %480 = vmatpush1.xpose.msra.mxu0 0.0
    %481 = vmatprep.subr.mxu0 0.0
    %482 = vmatpush1.xpose.msra.mxu0 0.0
    %483 = vmatprep.subr.mxu0 0.0
    %484 = vmatpush1.xpose.msra.mxu0 0.0
    %485 = vmatprep.subr.mxu0 0.0
    %486 = vmatpush1.xpose.msra.mxu0 0.0
    %487 = vmatprep.subr.mxu0 0.0
    %488 = vmatpush1.xpose.msra.mxu0 0.0
    %489 = vmatprep.subr.mxu0 0.0
    %490 = vmatpush1.xpose.msra.mxu0 0.0
    %491 = vmatprep.subr.mxu0 0.0
    %492 = vmatpush1.xpose.msra.mxu0 0.0
    %493 = vmatprep.subr.mxu0 0.0
    %494 = vmatpush1.xpose.msra.mxu0 0.0
    %495 = vmatprep.subr.mxu0 0.0
    %496 = vmatpush1.xpose.msra.mxu0 0.0
    %497 = vmatprep.subr.mxu0 0.0
    %498 = vmatpush1.xpose.msra.mxu0 0.0
    %499 = vmatprep.subr.mxu0 0.0
    %500 = vmatpush1.xpose.msra.mxu0 0.0
    %501 = vmatprep.subr.mxu0 0.0
    %502 = vmatpush1.xpose.msra.mxu0 0.0
    %503 = vmatprep.subr.mxu0 0.0
    %504 = vmatpush1.xpose.msra.mxu0 0.0
    %505 = vmatprep.subr.mxu0 0.0
    %506 = vmatpush1.xpose.msra.mxu0 0.0
    %507 = vmatprep.subr.mxu0 0.0
    %508 = vmatpush1.xpose.msra.mxu0 0.0
    %509 = vmatprep.subr.mxu0 0.0
    %510 = vmatpush1.xpose.msra.mxu0 %v477
    %511 = vmatprep.subr.mxu0 0.0
    %512 = vmatpush2.xpose.msra.mxu0 0.0
    %513 = vmatprep.subr.mxu0 0.0
    %514 = vmatpush2.xpose.msra.mxu0 0.0
    %515 = vmatprep.subr.mxu0 0.0
    %516 = vmatpush2.xpose.msra.mxu0 0.0
    %517 = vmatprep.subr.mxu0 0.0
    %518 = vmatpush2.xpose.msra.mxu0 0.0
    %519 = vmatprep.subr.mxu0 0.0
    %520 = vmatpush2.xpose.msra.mxu0 0.0
    %521 = vmatprep.subr.mxu0 0.0
    %522 = vmatpush2.xpose.msra.mxu0 0.0
    %523 = vmatprep.subr.mxu0 0.0
    %524 = vmatpush2.xpose.msra.mxu0 0.0
    %525 = vmatprep.subr.mxu0 0.0
    %526 = vmatpush2.xpose.msra.mxu0 0.0
    %527 = vmatprep.subr.mxu0 0.0
    %528 = vmatpush2.xpose.msra.mxu0 0.0
    %529 = vmatprep.subr.mxu0 0.0
    %530 = vmatpush2.xpose.msra.mxu0 0.0
    %531 = vmatprep.subr.mxu0 0.0
    %532 = vmatpush2.xpose.msra.mxu0 0.0
    %533 = vmatprep.subr.mxu0 0.0
    %534 = vmatpush2.xpose.msra.mxu0 0.0
    %535 = vmatprep.subr.mxu0 0.0
    %536 = vmatpush2.xpose.msra.mxu0 0.0
    %537 = vmatprep.subr.mxu0 0.0
    %538 = vmatpush2.xpose.msra.mxu0 0.0
    %539 = vmatprep.subr.mxu0 0.0
    %540 = vmatpush2.xpose.msra.mxu0 0.0
    %541 = vmatprep.subr.mxu0 0.0
    %542 = vmatpush2.xpose.msra.mxu0 0.0
    %543 = vmatprep.mubr.f32.mxu0 0.0
    %544 = vmatmul.mubr.f32.gmra.mxu0 %v475
    %v545 = vpop.f32.mrf.mxu0
    %v546 = vadd.f32 0.0, %v545
    %v547 = vpop.f32.mrf.mxu0
    %548 = vdwg.mxu0
    %549 = vrot.lane.b32.xlu0 %v163, 96
    %v550 = vpop.permute.xlu0 %549
    %v551 = vsel %vm170, %v163, 0
    %v553 = vsel %vm170, %v550, 0
    %555 = vmatprep.subr.mxu0 0.0
    %556 = vmatpush1.xpose.msra.mxu0 0.0
    %557 = vmatprep.subr.mxu0 0.0
    %558 = vmatpush1.xpose.msra.mxu0 0.0
    %559 = vmatprep.subr.mxu0 0.0
    %560 = vmatpush1.xpose.msra.mxu0 0.0
    %561 = vmatprep.subr.mxu0 0.0
    %562 = vmatpush1.xpose.msra.mxu0 0.0
    %563 = vmatprep.subr.mxu0 0.0
    %564 = vmatpush1.xpose.msra.mxu0 0.0
    %565 = vmatprep.subr.mxu0 0.0
    %566 = vmatpush1.xpose.msra.mxu0 0.0
    %567 = vmatprep.subr.mxu0 0.0
    %568 = vmatpush1.xpose.msra.mxu0 0.0
    %569 = vmatprep.subr.mxu0 0.0
    %570 = vmatpush1.xpose.msra.mxu0 0.0
    %571 = vmatprep.subr.mxu0 0.0
    %572 = vmatpush1.xpose.msra.mxu0 0.0
    %573 = vmatprep.subr.mxu0 0.0
    %574 = vmatpush1.xpose.msra.mxu0 0.0
    %575 = vmatprep.subr.mxu0 0.0
    %576 = vmatpush1.xpose.msra.mxu0 0.0
    %577 = vmatprep.subr.mxu0 0.0
    %578 = vmatpush1.xpose.msra.mxu0 0.0
    %579 = vmatprep.subr.mxu0 0.0
    %580 = vmatpush1.xpose.msra.mxu0 0.0
    %581 = vmatprep.subr.mxu0 0.0
    %582 = vmatpush1.xpose.msra.mxu0 0.0
    %583 = vmatprep.subr.mxu0 0.0
    %584 = vmatpush1.xpose.msra.mxu0 0.0
    %585 = vmatprep.subr.mxu0 0.0
    %586 = vmatpush1.xpose.msra.mxu0 %v553
    %587 = vmatprep.subr.mxu0 0.0
    %588 = vmatpush2.xpose.msra.mxu0 0.0
    %589 = vmatprep.subr.mxu0 0.0
    %590 = vmatpush2.xpose.msra.mxu0 0.0
    %591 = vmatprep.subr.mxu0 0.0
    %592 = vmatpush2.xpose.msra.mxu0 0.0
    %593 = vmatprep.subr.mxu0 0.0
    %594 = vmatpush2.xpose.msra.mxu0 0.0
    %595 = vmatprep.subr.mxu0 0.0
    %596 = vmatpush2.xpose.msra.mxu0 0.0
    %597 = vmatprep.subr.mxu0 0.0
    %598 = vmatpush2.xpose.msra.mxu0 0.0
    %599 = vmatprep.subr.mxu0 0.0
    %600 = vmatpush2.xpose.msra.mxu0 0.0
    %601 = vmatprep.subr.mxu0 0.0
    %602 = vmatpush2.xpose.msra.mxu0 0.0
    %603 = vmatprep.subr.mxu0 0.0
    %604 = vmatpush2.xpose.msra.mxu0 0.0
    %605 = vmatprep.subr.mxu0 0.0
    %606 = vmatpush2.xpose.msra.mxu0 0.0
    %607 = vmatprep.subr.mxu0 0.0
    %608 = vmatpush2.xpose.msra.mxu0 0.0
    %609 = vmatprep.subr.mxu0 0.0
    %610 = vmatpush2.xpose.msra.mxu0 0.0
    %611 = vmatprep.subr.mxu0 0.0
    %612 = vmatpush2.xpose.msra.mxu0 0.0
    %613 = vmatprep.subr.mxu0 0.0
    %614 = vmatpush2.xpose.msra.mxu0 0.0
    %615 = vmatprep.subr.mxu0 0.0
    %616 = vmatpush2.xpose.msra.mxu0 0.0
    %617 = vmatprep.subr.mxu0 0.0
    %618 = vmatpush2.xpose.msra.mxu0 0.0
    %619 = vmatprep.mubr.f32.mxu0 0.0
    %620 = vmatmul.mubr.f32.gmra.mxu0 %v551
    %v621 = vpop.f32.mrf.mxu0
    %v622 = vadd.f32 0.0, %v621
    %v623 = vpop.f32.mrf.mxu0
    %624 = vdwg.mxu0
    %625 = vrot.lane.b32.xlu0 %v165, 96
    %v626 = vpop.permute.xlu0 %625
    %v627 = vsel %vm170, %v165, 0
    %v629 = vsel %vm170, %v626, 0
    %631 = vmatprep.subr.mxu0 0.0
    %632 = vmatpush1.xpose.msra.mxu0 0.0
    %633 = vmatprep.subr.mxu0 0.0
    %634 = vmatpush1.xpose.msra.mxu0 0.0
    %635 = vmatprep.subr.mxu0 0.0
    %636 = vmatpush1.xpose.msra.mxu0 0.0
    %637 = vmatprep.subr.mxu0 0.0
    %638 = vmatpush1.xpose.msra.mxu0 0.0
    %639 = vmatprep.subr.mxu0 0.0
    %640 = vmatpush1.xpose.msra.mxu0 0.0
    %641 = vmatprep.subr.mxu0 0.0
    %642 = vmatpush1.xpose.msra.mxu0 0.0
    %643 = vmatprep.subr.mxu0 0.0
    %644 = vmatpush1.xpose.msra.mxu0 0.0
    %645 = vmatprep.subr.mxu0 0.0
    %646 = vmatpush1.xpose.msra.mxu0 0.0
    %647 = vmatprep.subr.mxu0 0.0
    %648 = vmatpush1.xpose.msra.mxu0 0.0
    %649 = vmatprep.subr.mxu0 0.0
    %650 = vmatpush1.xpose.msra.mxu0 0.0
    %651 = vmatprep.subr.mxu0 0.0
    %652 = vmatpush1.xpose.msra.mxu0 0.0
    %653 = vmatprep.subr.mxu0 0.0
    %654 = vmatpush1.xpose.msra.mxu0 0.0
    %655 = vmatprep.subr.mxu0 0.0
    %656 = vmatpush1.xpose.msra.mxu0 0.0
    %657 = vmatprep.subr.mxu0 0.0
    %658 = vmatpush1.xpose.msra.mxu0 0.0
    %659 = vmatprep.subr.mxu0 0.0
    %660 = vmatpush1.xpose.msra.mxu0 0.0
    %661 = vmatprep.subr.mxu0 0.0
    %662 = vmatpush1.xpose.msra.mxu0 %v629
    %663 = vmatprep.subr.mxu0 0.0
    %664 = vmatpush2.xpose.msra.mxu0 0.0
    %665 = vmatprep.subr.mxu0 0.0
    %666 = vmatpush2.xpose.msra.mxu0 0.0
    %667 = vmatprep.subr.mxu0 0.0
    %668 = vmatpush2.xpose.msra.mxu0 0.0
    %669 = vmatprep.subr.mxu0 0.0
    %670 = vmatpush2.xpose.msra.mxu0 0.0
    %671 = vmatprep.subr.mxu0 0.0
    %672 = vmatpush2.xpose.msra.mxu0 0.0
    %673 = vmatprep.subr.mxu0 0.0
    %674 = vmatpush2.xpose.msra.mxu0 0.0
    %675 = vmatprep.subr.mxu0 0.0
    %676 = vmatpush2.xpose.msra.mxu0 0.0
    %677 = vmatprep.subr.mxu0 0.0
    %678 = vmatpush2.xpose.msra.mxu0 0.0
    %679 = vmatprep.subr.mxu0 0.0
    %680 = vmatpush2.xpose.msra.mxu0 0.0
    %681 = vmatprep.subr.mxu0 0.0
    %682 = vmatpush2.xpose.msra.mxu0 0.0
    %683 = vmatprep.subr.mxu0 0.0
    %684 = vmatpush2.xpose.msra.mxu0 0.0
    %685 = vmatprep.subr.mxu0 0.0
    %686 = vmatpush2.xpose.msra.mxu0 0.0
    %687 = vmatprep.subr.mxu0 0.0
    %688 = vmatpush2.xpose.msra.mxu0 0.0
    %689 = vmatprep.subr.mxu0 0.0
    %690 = vmatpush2.xpose.msra.mxu0 0.0
    %691 = vmatprep.subr.mxu0 0.0
    %692 = vmatpush2.xpose.msra.mxu0 0.0
    %693 = vmatprep.subr.mxu0 0.0
    %694 = vmatpush2.xpose.msra.mxu0 0.0
    %695 = vmatprep.mubr.f32.mxu0 0.0
    %696 = vmatmul.mubr.f32.gmra.mxu0 %v627
    %v697 = vpop.f32.mrf.mxu0
    %v698 = vadd.f32 0.0, %v697
    %v699 = vpop.f32.mrf.mxu0
    %700 = vdwg.mxu0
    %701 = vrot.lane.b32.xlu0 %v167, 96
    %v702 = vpop.permute.xlu0 %701
    %v703 = vsel %vm170, %v167, 0
    %v705 = vsel %vm170, %v702, 0
    %707 = vmatprep.subr.mxu0 0.0
    %708 = vmatpush1.xpose.msra.mxu0 0.0
    %709 = vmatprep.subr.mxu0 0.0
    %710 = vmatpush1.xpose.msra.mxu0 0.0
    %711 = vmatprep.subr.mxu0 0.0
    %712 = vmatpush1.xpose.msra.mxu0 0.0
    %713 = vmatprep.subr.mxu0 0.0
    %714 = vmatpush1.xpose.msra.mxu0 0.0
    %715 = vmatprep.subr.mxu0 0.0
    %716 = vmatpush1.xpose.msra.mxu0 0.0
    %717 = vmatprep.subr.mxu0 0.0
    %718 = vmatpush1.xpose.msra.mxu0 0.0
    %719 = vmatprep.subr.mxu0 0.0
    %720 = vmatpush1.xpose.msra.mxu0 0.0
    %721 = vmatprep.subr.mxu0 0.0
    %722 = vmatpush1.xpose.msra.mxu0 0.0
    %723 = vmatprep.subr.mxu0 0.0
    %724 = vmatpush1.xpose.msra.mxu0 0.0
    %725 = vmatprep.subr.mxu0 0.0
    %726 = vmatpush1.xpose.msra.mxu0 0.0
    %727 = vmatprep.subr.mxu0 0.0
    %728 = vmatpush1.xpose.msra.mxu0 0.0
    %729 = vmatprep.subr.mxu0 0.0
    %730 = vmatpush1.xpose.msra.mxu0 0.0
    %731 = vmatprep.subr.mxu0 0.0
    %732 = vmatpush1.xpose.msra.mxu0 0.0
    %733 = vmatprep.subr.mxu0 0.0
    %734 = vmatpush1.xpose.msra.mxu0 0.0
    %735 = vmatprep.subr.mxu0 0.0
    %736 = vmatpush1.xpose.msra.mxu0 0.0
    %737 = vmatprep.subr.mxu0 0.0
    %738 = vmatpush1.xpose.msra.mxu0 %v705
    %739 = vmatprep.subr.mxu0 0.0
    %740 = vmatpush2.xpose.msra.mxu0 0.0
    %741 = vmatprep.subr.mxu0 0.0
    %742 = vmatpush2.xpose.msra.mxu0 0.0
    %743 = vmatprep.subr.mxu0 0.0
    %744 = vmatpush2.xpose.msra.mxu0 0.0
    %745 = vmatprep.subr.mxu0 0.0
    %746 = vmatpush2.xpose.msra.mxu0 0.0
    %747 = vmatprep.subr.mxu0 0.0
    %748 = vmatpush2.xpose.msra.mxu0 0.0
    %749 = vmatprep.subr.mxu0 0.0
    %750 = vmatpush2.xpose.msra.mxu0 0.0
    %751 = vmatprep.subr.mxu0 0.0
    %752 = vmatpush2.xpose.msra.mxu0 0.0
    %753 = vmatprep.subr.mxu0 0.0
    %754 = vmatpush2.xpose.msra.mxu0 0.0
    %755 = vmatprep.subr.mxu0 0.0
    %756 = vmatpush2.xpose.msra.mxu0 0.0
    %757 = vmatprep.subr.mxu0 0.0
    %758 = vmatpush2.xpose.msra.mxu0 0.0
    %759 = vmatprep.subr.mxu0 0.0
    %760 = vmatpush2.xpose.msra.mxu0 0.0
    %761 = vmatprep.subr.mxu0 0.0
    %762 = vmatpush2.xpose.msra.mxu0 0.0
    %763 = vmatprep.subr.mxu0 0.0
    %764 = vmatpush2.xpose.msra.mxu0 0.0
    %765 = vmatprep.subr.mxu0 0.0
    %766 = vmatpush2.xpose.msra.mxu0 0.0
    %767 = vmatprep.subr.mxu0 0.0
    %768 = vmatpush2.xpose.msra.mxu0 0.0
    %769 = vmatprep.subr.mxu0 0.0
    %770 = vmatpush2.xpose.msra.mxu0 0.0
    %771 = vmatprep.mubr.f32.mxu0 0.0
    %772 = vmatmul.mubr.f32.gmra.mxu0 %v703
    %v773 = vpop.f32.mrf.mxu0
    %v774 = vadd.f32 0.0, %v773
    %v775 = vpop.f32.mrf.mxu0
    %776 = vdwg.mxu0
    %v777 = vmul.f32 %v242, 0.35355338
    %v778 = vmul.f32 %v318, 0.35355338
    %v779 = vmul.f32 %v394, 0.35355338
    %v780 = vmul.f32 %v470, 0.35355338
    %v781 = vmul.f32 %v546, 0.35355338
    %v782 = vmul.f32 %v622, 0.35355338
    %v783 = vmul.f32 %v698, 0.35355338
    %v784 = vmul.f32 %v774, 0.35355338
    %v785 = vsel %vm170, %v777, -inf
    %786 = vmax.xlane.f32.xlu0 %v785
    %v787 = vpop.xlane.xlu0 %786
    %v788 = vsel %vm170, %v778, -inf
    %789 = vmax.xlane.f32.xlu0 %v788
    %v790 = vpop.xlane.xlu0 %789
    %v791 = vsel %vm170, %v779, -inf
    %792 = vmax.xlane.f32.xlu0 %v791
    %v793 = vpop.xlane.xlu0 %792
    %v794 = vsel %vm170, %v780, -inf
    %795 = vmax.xlane.f32.xlu0 %v794
    %v796 = vpop.xlane.xlu0 %795
    %v797 = vsel %vm170, %v781, -inf
    %798 = vmax.xlane.f32.xlu0 %v797
    %v799 = vpop.xlane.xlu0 %798
    %v800 = vsel %vm170, %v782, -inf
    %801 = vmax.xlane.f32.xlu0 %v800
    %v802 = vpop.xlane.xlu0 %801
    %v803 = vsel %vm170, %v783, -inf
    %804 = vmax.xlane.f32.xlu0 %v803
    %v805 = vpop.xlane.xlu0 %804
    %v806 = vsel %vm170, %v784, -inf
    %807 = vmax.xlane.f32.xlu0 %v806
    %v808 = vpop.xlane.xlu0 %807
    %v809 = vsub.f32 %v777, %v787
    %v810 = vsub.f32 %v778, %v790
    %v811 = vsub.f32 %v779, %v793
    %v812 = vsub.f32 %v780, %v796
    %v813 = vsub.f32 %v781, %v799
    %v814 = vsub.f32 %v782, %v802
    %v815 = vsub.f32 %v783, %v805
    %v816 = vsub.f32 %v784, %v808
    %v817 = vmul.f32 %v809, 1.442695
    %v818 = vpow.pop %v817
    %v819 = vmul.f32 %v810, 1.442695
    %v820 = vpow.pop %v819
    %v821 = vmul.f32 %v811, 1.442695
    %v822 = vpow.pop %v821
    %v823 = vmul.f32 %v812, 1.442695
    %v824 = vpow.pop %v823
    %v825 = vmul.f32 %v813, 1.442695
    %v826 = vpow.pop %v825
    %v827 = vmul.f32 %v814, 1.442695
    %v828 = vpow.pop %v827
    %v829 = vmul.f32 %v815, 1.442695
    %v830 = vpow.pop %v829
    %v831 = vmul.f32 %v816, 1.442695
    %v832 = vpow.pop %v831
    %833 = vrot.lane.b32.xlu0 %v146, 64
    %v834 = vpop.permute.xlu0 %833
    %v837 = vsel %vm170, %v818, 0
    %839 = vmatprep.subr.mxu0 0.0
    %840 = vmatpush1.msra.mxu0 0.0
    %841 = vmatprep.subr.mxu0 0.0
    %842 = vmatpush1.msra.mxu0 0.0
    %843 = vmatprep.subr.mxu0 0.0
    %844 = vmatpush1.msra.mxu0 0.0
    %845 = vmatprep.subr.mxu0 0.0
    %846 = vmatpush1.msra.mxu0 0.0
    %847 = vmatprep.subr.mxu0 0.0
    %848 = vmatpush1.msra.mxu0 0.0
    %849 = vmatprep.subr.mxu0 0.0
    %850 = vmatpush1.msra.mxu0 0.0
    %851 = vmatprep.subr.mxu0 0.0
    %852 = vmatpush1.msra.mxu0 0.0
    %853 = vmatprep.subr.mxu0 0.0
    %854 = vmatpush1.msra.mxu0 0.0
    %855 = vmatprep.subr.mxu0 0.0
    %856 = vmatpush1.msra.mxu0 0.0
    %857 = vmatprep.subr.mxu0 0.0
    %858 = vmatpush1.msra.mxu0 0.0
    %859 = vmatprep.subr.mxu0 0.0
    %860 = vmatpush1.msra.mxu0 0.0
    %861 = vmatprep.subr.mxu0 0.0
    %862 = vmatpush1.msra.mxu0 0.0
    %863 = vmatprep.subr.mxu0 0.0
    %864 = vmatpush1.msra.mxu0 0.0
    %865 = vmatprep.subr.mxu0 0.0
    %866 = vmatpush1.msra.mxu0 0.0
    %867 = vmatprep.subr.mxu0 0.0
    %868 = vmatpush1.msra.mxu0 0.0
    %869 = vmatprep.subr.mxu0 0.0
    %870 = vmatpush1.msra.mxu0 %v834
    %871 = vmatprep.subr.mxu0 0.0
    %872 = vmatpush2.msra.mxu0 0.0
    %873 = vmatprep.subr.mxu0 0.0
    %874 = vmatpush2.msra.mxu0 0.0
    %875 = vmatprep.subr.mxu0 0.0
    %876 = vmatpush2.msra.mxu0 0.0
    %877 = vmatprep.subr.mxu0 0.0
    %878 = vmatpush2.msra.mxu0 0.0
    %879 = vmatprep.subr.mxu0 0.0
    %880 = vmatpush2.msra.mxu0 0.0
    %881 = vmatprep.subr.mxu0 0.0
    %882 = vmatpush2.msra.mxu0 0.0
    %883 = vmatprep.subr.mxu0 0.0
    %884 = vmatpush2.msra.mxu0 0.0
    %885 = vmatprep.subr.mxu0 0.0
    %886 = vmatpush2.msra.mxu0 0.0
    %887 = vmatprep.subr.mxu0 0.0
    %888 = vmatpush2.msra.mxu0 0.0
    %889 = vmatprep.subr.mxu0 0.0
    %890 = vmatpush2.msra.mxu0 0.0
    %891 = vmatprep.subr.mxu0 0.0
    %892 = vmatpush2.msra.mxu0 0.0
    %893 = vmatprep.subr.mxu0 0.0
    %894 = vmatpush2.msra.mxu0 0.0
    %895 = vmatprep.subr.mxu0 0.0
    %896 = vmatpush2.msra.mxu0 0.0
    %897 = vmatprep.subr.mxu0 0.0
    %898 = vmatpush2.msra.mxu0 0.0
    %899 = vmatprep.subr.mxu0 0.0
    %900 = vmatpush2.msra.mxu0 0.0
    %901 = vmatprep.subr.mxu0 0.0
    %902 = vmatpush2.msra.mxu0 0.0
    %903 = vmatprep.mubr.f32.mxu0 0.0
    %904 = vmatmul.mubr.f32.gmra.mxu0 %v837
    %v905 = vpop.f32.mrf.mxu0
    %v906 = vadd.f32 0.0, %v905
    %v907 = vpop.f32.mrf.mxu0
    %908 = vdwg.mxu0
    %909 = vrot.lane.b32.xlu0 %v151, 64
    %v910 = vpop.permute.xlu0 %909
    %v913 = vsel %vm170, %v820, 0
    %915 = vmatprep.subr.mxu0 0.0
    %916 = vmatpush1.msra.mxu0 0.0
    %917 = vmatprep.subr.mxu0 0.0
    %918 = vmatpush1.msra.mxu0 0.0
    %919 = vmatprep.subr.mxu0 0.0
    %920 = vmatpush1.msra.mxu0 0.0
    %921 = vmatprep.subr.mxu0 0.0
    %922 = vmatpush1.msra.mxu0 0.0
    %923 = vmatprep.subr.mxu0 0.0
    %924 = vmatpush1.msra.mxu0 0.0
    %925 = vmatprep.subr.mxu0 0.0
    %926 = vmatpush1.msra.mxu0 0.0
    %927 = vmatprep.subr.mxu0 0.0
    %928 = vmatpush1.msra.mxu0 0.0
    %929 = vmatprep.subr.mxu0 0.0
    %930 = vmatpush1.msra.mxu0 0.0
    %931 = vmatprep.subr.mxu0 0.0
    %932 = vmatpush1.msra.mxu0 0.0
    %933 = vmatprep.subr.mxu0 0.0
    %934 = vmatpush1.msra.mxu0 0.0
    %935 = vmatprep.subr.mxu0 0.0
    %936 = vmatpush1.msra.mxu0 0.0
    %937 = vmatprep.subr.mxu0 0.0
    %938 = vmatpush1.msra.mxu0 0.0
    %939 = vmatprep.subr.mxu0 0.0
    %940 = vmatpush1.msra.mxu0 0.0
    %941 = vmatprep.subr.mxu0 0.0
    %942 = vmatpush1.msra.mxu0 0.0
    %943 = vmatprep.subr.mxu0 0.0
    %944 = vmatpush1.msra.mxu0 0.0
    %945 = vmatprep.subr.mxu0 0.0
    %946 = vmatpush1.msra.mxu0 %v910
    %947 = vmatprep.subr.mxu0 0.0
    %948 = vmatpush2.msra.mxu0 0.0
    %949 = vmatprep.subr.mxu0 0.0
    %950 = vmatpush2.msra.mxu0 0.0
    %951 = vmatprep.subr.mxu0 0.0
    %952 = vmatpush2.msra.mxu0 0.0
    %953 = vmatprep.subr.mxu0 0.0
    %954 = vmatpush2.msra.mxu0 0.0
    %955 = vmatprep.subr.mxu0 0.0
    %956 = vmatpush2.msra.mxu0 0.0
    %957 = vmatprep.subr.mxu0 0.0
    %958 = vmatpush2.msra.mxu0 0.0
    %959 = vmatprep.subr.mxu0 0.0
    %960 = vmatpush2.msra.mxu0 0.0
    %961 = vmatprep.subr.mxu0 0.0
    %962 = vmatpush2.msra.mxu0 0.0
    %963 = vmatprep.subr.mxu0 0.0
    %964 = vmatpush2.msra.mxu0 0.0
    %965 = vmatprep.subr.mxu0 0.0
    %966 = vmatpush2.msra.mxu0 0.0
    %967 = vmatprep.subr.mxu0 0.0
    %968 = vmatpush2.msra.mxu0 0.0
    %969 = vmatprep.subr.mxu0 0.0
    %970 = vmatpush2.msra.mxu0 0.0
    %971 = vmatprep.subr.mxu0 0.0
    %972 = vmatpush2.msra.mxu0 0.0
    %973 = vmatprep.subr.mxu0 0.0
    %974 = vmatpush2.msra.mxu0 0.0
    %975 = vmatprep.subr.mxu0 0.0
    %976 = vmatpush2.msra.mxu0 0.0
    %977 = vmatprep.subr.mxu0 0.0
    %978 = vmatpush2.msra.mxu0 0.0
    %979 = vmatprep.mubr.f32.mxu0 0.0
    %980 = vmatmul.mubr.f32.gmra.mxu0 %v913
    %v981 = vpop.f32.mrf.mxu0
    %v982 = vadd.f32 0.0, %v981
    %v983 = vpop.f32.mrf.mxu0
    %984 = vdwg.mxu0
    %985 = vrot.lane.b32.xlu0 %v157, 64
    %v986 = vpop.permute.xlu0 %985
    %v989 = vsel %vm170, %v822, 0
    %991 = vmatprep.subr.mxu0 0.0
    %992 = vmatpush1.msra.mxu0 0.0
    %993 = vmatprep.subr.mxu0 0.0
    %994 = vmatpush1.msra.mxu0 0.0
    %995 = vmatprep.subr.mxu0 0.0
    %996 = vmatpush1.msra.mxu0 0.0
    %997 = vmatprep.subr.mxu0 0.0
    %998 = vmatpush1.msra.mxu0 0.0
    %999 = vmatprep.subr.mxu0 0.0
    %1000 = vmatpush1.msra.mxu0 0.0
    %1001 = vmatprep.subr.mxu0 0.0
    %1002 = vmatpush1.msra.mxu0 0.0
    %1003 = vmatprep.subr.mxu0 0.0
    %1004 = vmatpush1.msra.mxu0 0.0
    %1005 = vmatprep.subr.mxu0 0.0
    %1006 = vmatpush1.msra.mxu0 0.0
    %1007 = vmatprep.subr.mxu0 0.0
    %1008 = vmatpush1.msra.mxu0 0.0
    %1009 = vmatprep.subr.mxu0 0.0
    %1010 = vmatpush1.msra.mxu0 0.0
    %1011 = vmatprep.subr.mxu0 0.0
    %1012 = vmatpush1.msra.mxu0 0.0
    %1013 = vmatprep.subr.mxu0 0.0
    %1014 = vmatpush1.msra.mxu0 0.0
    %1015 = vmatprep.subr.mxu0 0.0
    %1016 = vmatpush1.msra.mxu0 0.0
    %1017 = vmatprep.subr.mxu0 0.0
    %1018 = vmatpush1.msra.mxu0 0.0
    %1019 = vmatprep.subr.mxu0 0.0
    %1020 = vmatpush1.msra.mxu0 0.0
    %1021 = vmatprep.subr.mxu0 0.0
    %1022 = vmatpush1.msra.mxu0 %v986
    %1023 = vmatprep.subr.mxu0 0.0
    %1024 = vmatpush2.msra.mxu0 0.0
    %1025 = vmatprep.subr.mxu0 0.0
    %1026 = vmatpush2.msra.mxu0 0.0
    %1027 = vmatprep.subr.mxu0 0.0
    %1028 = vmatpush2.msra.mxu0 0.0
    %1029 = vmatprep.subr.mxu0 0.0
    %1030 = vmatpush2.msra.mxu0 0.0
    %1031 = vmatprep.subr.mxu0 0.0
    %1032 = vmatpush2.msra.mxu0 0.0
    %1033 = vmatprep.subr.mxu0 0.0
    %1034 = vmatpush2.msra.mxu0 0.0
    %1035 = vmatprep.subr.mxu0 0.0
    %1036 = vmatpush2.msra.mxu0 0.0
    %1037 = vmatprep.subr.mxu0 0.0
    %1038 = vmatpush2.msra.mxu0 0.0
    %1039 = vmatprep.subr.mxu0 0.0
    %1040 = vmatpush2.msra.mxu0 0.0
    %1041 = vmatprep.subr.mxu0 0.0
    %1042 = vmatpush2.msra.mxu0 0.0
    %1043 = vmatprep.subr.mxu0 0.0
    %1044 = vmatpush2.msra.mxu0 0.0
    %1045 = vmatprep.subr.mxu0 0.0
    %1046 = vmatpush2.msra.mxu0 0.0
    %1047 = vmatprep.subr.mxu0 0.0
    %1048 = vmatpush2.msra.mxu0 0.0
    %1049 = vmatprep.subr.mxu0 0.0
    %1050 = vmatpush2.msra.mxu0 0.0
    %1051 = vmatprep.subr.mxu0 0.0
    %1052 = vmatpush2.msra.mxu0 0.0
    %1053 = vmatprep.subr.mxu0 0.0
    %1054 = vmatpush2.msra.mxu0 0.0
    %1055 = vmatprep.mubr.f32.mxu0 0.0
    %1056 = vmatmul.mubr.f32.gmra.mxu0 %v989
    %v1057 = vpop.f32.mrf.mxu0
    %v1058 = vadd.f32 0.0, %v1057
    %v1059 = vpop.f32.mrf.mxu0
    %1060 = vdwg.mxu0
    %1061 = vrot.lane.b32.xlu0 %v159, 64
    %v1062 = vpop.permute.xlu0 %1061
    %v1065 = vsel %vm170, %v824, 0
    %1067 = vmatprep.subr.mxu0 0.0
    %1068 = vmatpush1.msra.mxu0 0.0
    %1069 = vmatprep.subr.mxu0 0.0
    %1070 = vmatpush1.msra.mxu0 0.0
    %1071 = vmatprep.subr.mxu0 0.0
    %1072 = vmatpush1.msra.mxu0 0.0
    %1073 = vmatprep.subr.mxu0 0.0
    %1074 = vmatpush1.msra.mxu0 0.0
    %1075 = vmatprep.subr.mxu0 0.0
    %1076 = vmatpush1.msra.mxu0 0.0
    %1077 = vmatprep.subr.mxu0 0.0
    %1078 = vmatpush1.msra.mxu0 0.0
    %1079 = vmatprep.subr.mxu0 0.0
    %1080 = vmatpush1.msra.mxu0 0.0
    %1081 = vmatprep.subr.mxu0 0.0
    %1082 = vmatpush1.msra.mxu0 0.0
    %1083 = vmatprep.subr.mxu0 0.0
    %1084 = vmatpush1.msra.mxu0 0.0
    %1085 = vmatprep.subr.mxu0 0.0
    %1086 = vmatpush1.msra.mxu0 0.0
    %1087 = vmatprep.subr.mxu0 0.0
    %1088 = vmatpush1.msra.mxu0 0.0
    %1089 = vmatprep.subr.mxu0 0.0
    %1090 = vmatpush1.msra.mxu0 0.0
    %1091 = vmatprep.subr.mxu0 0.0
    %1092 = vmatpush1.msra.mxu0 0.0
    %1093 = vmatprep.subr.mxu0 0.0
    %1094 = vmatpush1.msra.mxu0 0.0
    %1095 = vmatprep.subr.mxu0 0.0
    %1096 = vmatpush1.msra.mxu0 0.0
    %1097 = vmatprep.subr.mxu0 0.0
    %1098 = vmatpush1.msra.mxu0 %v1062
    %1099 = vmatprep.subr.mxu0 0.0
    %1100 = vmatpush2.msra.mxu0 0.0
    %1101 = vmatprep.subr.mxu0 0.0
    %1102 = vmatpush2.msra.mxu0 0.0
    %1103 = vmatprep.subr.mxu0 0.0
    %1104 = vmatpush2.msra.mxu0 0.0
    %1105 = vmatprep.subr.mxu0 0.0
    %1106 = vmatpush2.msra.mxu0 0.0
    %1107 = vmatprep.subr.mxu0 0.0
    %1108 = vmatpush2.msra.mxu0 0.0
    %1109 = vmatprep.subr.mxu0 0.0
    %1110 = vmatpush2.msra.mxu0 0.0
    %1111 = vmatprep.subr.mxu0 0.0
    %1112 = vmatpush2.msra.mxu0 0.0
    %1113 = vmatprep.subr.mxu0 0.0
    %1114 = vmatpush2.msra.mxu0 0.0
    %1115 = vmatprep.subr.mxu0 0.0
    %1116 = vmatpush2.msra.mxu0 0.0
    %1117 = vmatprep.subr.mxu0 0.0
    %1118 = vmatpush2.msra.mxu0 0.0
    %1119 = vmatprep.subr.mxu0 0.0
    %1120 = vmatpush2.msra.mxu0 0.0
    %1121 = vmatprep.subr.mxu0 0.0
    %1122 = vmatpush2.msra.mxu0 0.0
    %1123 = vmatprep.subr.mxu0 0.0
    %1124 = vmatpush2.msra.mxu0 0.0
    %1125 = vmatprep.subr.mxu0 0.0
    %1126 = vmatpush2.msra.mxu0 0.0
    %1127 = vmatprep.subr.mxu0 0.0
    %1128 = vmatpush2.msra.mxu0 0.0
    %1129 = vmatprep.subr.mxu0 0.0
    %1130 = vmatpush2.msra.mxu0 0.0
    %1131 = vmatprep.mubr.f32.mxu0 0.0
    %1132 = vmatmul.mubr.f32.gmra.mxu0 %v1065
    %v1133 = vpop.f32.mrf.mxu0
    %v1134 = vadd.f32 0.0, %v1133
    %v1135 = vpop.f32.mrf.mxu0
    %1136 = vdwg.mxu0
    %1137 = vrot.lane.b32.xlu0 %v161, 64
    %v1138 = vpop.permute.xlu0 %1137
    %v1141 = vsel %vm170, %v826, 0
    %1143 = vmatprep.subr.mxu0 0.0
    %1144 = vmatpush1.msra.mxu0 0.0
    %1145 = vmatprep.subr.mxu0 0.0
    %1146 = vmatpush1.msra.mxu0 0.0
    %1147 = vmatprep.subr.mxu0 0.0
    %1148 = vmatpush1.msra.mxu0 0.0
    %1149 = vmatprep.subr.mxu0 0.0
    %1150 = vmatpush1.msra.mxu0 0.0
    %1151 = vmatprep.subr.mxu0 0.0
    %1152 = vmatpush1.msra.mxu0 0.0
    %1153 = vmatprep.subr.mxu0 0.0
    %1154 = vmatpush1.msra.mxu0 0.0
    %1155 = vmatprep.subr.mxu0 0.0
    %1156 = vmatpush1.msra.mxu0 0.0
    %1157 = vmatprep.subr.mxu0 0.0
    %1158 = vmatpush1.msra.mxu0 0.0
    %1159 = vmatprep.subr.mxu0 0.0
    %1160 = vmatpush1.msra.mxu0 0.0
    %1161 = vmatprep.subr.mxu0 0.0
    %1162 = vmatpush1.msra.mxu0 0.0
    %1163 = vmatprep.subr.mxu0 0.0
    %1164 = vmatpush1.msra.mxu0 0.0
    %1165 = vmatprep.subr.mxu0 0.0
    %1166 = vmatpush1.msra.mxu0 0.0
    %1167 = vmatprep.subr.mxu0 0.0
    %1168 = vmatpush1.msra.mxu0 0.0
    %1169 = vmatprep.subr.mxu0 0.0
    %1170 = vmatpush1.msra.mxu0 0.0
    %1171 = vmatprep.subr.mxu0 0.0
    %1172 = vmatpush1.msra.mxu0 0.0
    %1173 = vmatprep.subr.mxu0 0.0
    %1174 = vmatpush1.msra.mxu0 %v1138
    %1175 = vmatprep.subr.mxu0 0.0
    %1176 = vmatpush2.msra.mxu0 0.0
    %1177 = vmatprep.subr.mxu0 0.0
    %1178 = vmatpush2.msra.mxu0 0.0
    %1179 = vmatprep.subr.mxu0 0.0
    %1180 = vmatpush2.msra.mxu0 0.0
    %1181 = vmatprep.subr.mxu0 0.0
    %1182 = vmatpush2.msra.mxu0 0.0
    %1183 = vmatprep.subr.mxu0 0.0
    %1184 = vmatpush2.msra.mxu0 0.0
    %1185 = vmatprep.subr.mxu0 0.0
    %1186 = vmatpush2.msra.mxu0 0.0
    %1187 = vmatprep.subr.mxu0 0.0
    %1188 = vmatpush2.msra.mxu0 0.0
    %1189 = vmatprep.subr.mxu0 0.0
    %1190 = vmatpush2.msra.mxu0 0.0
    %1191 = vmatprep.subr.mxu0 0.0
    %1192 = vmatpush2.msra.mxu0 0.0
    %1193 = vmatprep.subr.mxu0 0.0
    %1194 = vmatpush2.msra.mxu0 0.0
    %1195 = vmatprep.subr.mxu0 0.0
    %1196 = vmatpush2.msra.mxu0 0.0
    %1197 = vmatprep.subr.mxu0 0.0
    %1198 = vmatpush2.msra.mxu0 0.0
    %1199 = vmatprep.subr.mxu0 0.0
    %1200 = vmatpush2.msra.mxu0 0.0
    %1201 = vmatprep.subr.mxu0 0.0
    %1202 = vmatpush2.msra.mxu0 0.0
    %1203 = vmatprep.subr.mxu0 0.0
    %1204 = vmatpush2.msra.mxu0 0.0
    %1205 = vmatprep.subr.mxu0 0.0
    %1206 = vmatpush2.msra.mxu0 0.0
    %1207 = vmatprep.mubr.f32.mxu0 0.0
    %1208 = vmatmul.mubr.f32.gmra.mxu0 %v1141
    %v1209 = vpop.f32.mrf.mxu0
    %v1210 = vadd.f32 0.0, %v1209
    %v1211 = vpop.f32.mrf.mxu0
    %1212 = vdwg.mxu0
    %1213 = vrot.lane.b32.xlu0 %v163, 64
    %v1214 = vpop.permute.xlu0 %1213
    %v1217 = vsel %vm170, %v828, 0
    %1219 = vmatprep.subr.mxu0 0.0
    %1220 = vmatpush1.msra.mxu0 0.0
    %1221 = vmatprep.subr.mxu0 0.0
    %1222 = vmatpush1.msra.mxu0 0.0
    %1223 = vmatprep.subr.mxu0 0.0
    %1224 = vmatpush1.msra.mxu0 0.0
    %1225 = vmatprep.subr.mxu0 0.0
    %1226 = vmatpush1.msra.mxu0 0.0
    %1227 = vmatprep.subr.mxu0 0.0
    %1228 = vmatpush1.msra.mxu0 0.0
    %1229 = vmatprep.subr.mxu0 0.0
    %1230 = vmatpush1.msra.mxu0 0.0
    %1231 = vmatprep.subr.mxu0 0.0
    %1232 = vmatpush1.msra.mxu0 0.0
    %1233 = vmatprep.subr.mxu0 0.0
    %1234 = vmatpush1.msra.mxu0 0.0
    %1235 = vmatprep.subr.mxu0 0.0
    %1236 = vmatpush1.msra.mxu0 0.0
    %1237 = vmatprep.subr.mxu0 0.0
    %1238 = vmatpush1.msra.mxu0 0.0
    %1239 = vmatprep.subr.mxu0 0.0
    %1240 = vmatpush1.msra.mxu0 0.0
    %1241 = vmatprep.subr.mxu0 0.0
    %1242 = vmatpush1.msra.mxu0 0.0
    %1243 = vmatprep.subr.mxu0 0.0
    %1244 = vmatpush1.msra.mxu0 0.0
    %1245 = vmatprep.subr.mxu0 0.0
    %1246 = vmatpush1.msra.mxu0 0.0
    %1247 = vmatprep.subr.mxu0 0.0
    %1248 = vmatpush1.msra.mxu0 0.0
    %1249 = vmatprep.subr.mxu0 0.0
    %1250 = vmatpush1.msra.mxu0 %v1214
    %1251 = vmatprep.subr.mxu0 0.0
    %1252 = vmatpush2.msra.mxu0 0.0
    %1253 = vmatprep.subr.mxu0 0.0
    %1254 = vmatpush2.msra.mxu0 0.0
    %1255 = vmatprep.subr.mxu0 0.0
    %1256 = vmatpush2.msra.mxu0 0.0
    %1257 = vmatprep.subr.mxu0 0.0
    %1258 = vmatpush2.msra.mxu0 0.0
    %1259 = vmatprep.subr.mxu0 0.0
    %1260 = vmatpush2.msra.mxu0 0.0
    %1261 = vmatprep.subr.mxu0 0.0
    %1262 = vmatpush2.msra.mxu0 0.0
    %1263 = vmatprep.subr.mxu0 0.0
    %1264 = vmatpush2.msra.mxu0 0.0
    %1265 = vmatprep.subr.mxu0 0.0
    %1266 = vmatpush2.msra.mxu0 0.0
    %1267 = vmatprep.subr.mxu0 0.0
    %1268 = vmatpush2.msra.mxu0 0.0
    %1269 = vmatprep.subr.mxu0 0.0
    %1270 = vmatpush2.msra.mxu0 0.0
    %1271 = vmatprep.subr.mxu0 0.0
    %1272 = vmatpush2.msra.mxu0 0.0
    %1273 = vmatprep.subr.mxu0 0.0
    %1274 = vmatpush2.msra.mxu0 0.0
    %1275 = vmatprep.subr.mxu0 0.0
    %1276 = vmatpush2.msra.mxu0 0.0
    %1277 = vmatprep.subr.mxu0 0.0
    %1278 = vmatpush2.msra.mxu0 0.0
    %1279 = vmatprep.subr.mxu0 0.0
    %1280 = vmatpush2.msra.mxu0 0.0
    %1281 = vmatprep.subr.mxu0 0.0
    %1282 = vmatpush2.msra.mxu0 0.0
    %1283 = vmatprep.mubr.f32.mxu0 0.0
    %1284 = vmatmul.mubr.f32.gmra.mxu0 %v1217
    %v1285 = vpop.f32.mrf.mxu0
    %v1286 = vadd.f32 0.0, %v1285
    %v1287 = vpop.f32.mrf.mxu0
    %1288 = vdwg.mxu0
    %1289 = vrot.lane.b32.xlu0 %v165, 64
    %v1290 = vpop.permute.xlu0 %1289
    %v1293 = vsel %vm170, %v830, 0
    %1295 = vmatprep.subr.mxu0 0.0
    %1296 = vmatpush1.msra.mxu0 0.0
    %1297 = vmatprep.subr.mxu0 0.0
    %1298 = vmatpush1.msra.mxu0 0.0
    %1299 = vmatprep.subr.mxu0 0.0
    %1300 = vmatpush1.msra.mxu0 0.0
    %1301 = vmatprep.subr.mxu0 0.0
    %1302 = vmatpush1.msra.mxu0 0.0
    %1303 = vmatprep.subr.mxu0 0.0
    %1304 = vmatpush1.msra.mxu0 0.0
    %1305 = vmatprep.subr.mxu0 0.0
    %1306 = vmatpush1.msra.mxu0 0.0
    %1307 = vmatprep.subr.mxu0 0.0
    %1308 = vmatpush1.msra.mxu0 0.0
    %1309 = vmatprep.subr.mxu0 0.0
    %1310 = vmatpush1.msra.mxu0 0.0
    %1311 = vmatprep.subr.mxu0 0.0
    %1312 = vmatpush1.msra.mxu0 0.0
    %1313 = vmatprep.subr.mxu0 0.0
    %1314 = vmatpush1.msra.mxu0 0.0
    %1315 = vmatprep.subr.mxu0 0.0
    %1316 = vmatpush1.msra.mxu0 0.0
    %1317 = vmatprep.subr.mxu0 0.0
    %1318 = vmatpush1.msra.mxu0 0.0
    %1319 = vmatprep.subr.mxu0 0.0
    %1320 = vmatpush1.msra.mxu0 0.0
    %1321 = vmatprep.subr.mxu0 0.0
    %1322 = vmatpush1.msra.mxu0 0.0
    %1323 = vmatprep.subr.mxu0 0.0
    %1324 = vmatpush1.msra.mxu0 0.0
    %1325 = vmatprep.subr.mxu0 0.0
    %1326 = vmatpush1.msra.mxu0 %v1290
    %1327 = vmatprep.subr.mxu0 0.0
    %1328 = vmatpush2.msra.mxu0 0.0
    %1329 = vmatprep.subr.mxu0 0.0
    %1330 = vmatpush2.msra.mxu0 0.0
    %1331 = vmatprep.subr.mxu0 0.0
    %1332 = vmatpush2.msra.mxu0 0.0
    %1333 = vmatprep.subr.mxu0 0.0
    %1334 = vmatpush2.msra.mxu0 0.0
    %1335 = vmatprep.subr.mxu0 0.0
    %1336 = vmatpush2.msra.mxu0 0.0
    %1337 = vmatprep.subr.mxu0 0.0
    %1338 = vmatpush2.msra.mxu0 0.0
    %1339 = vmatprep.subr.mxu0 0.0
    %1340 = vmatpush2.msra.mxu0 0.0
    %1341 = vmatprep.subr.mxu0 0.0
    %1342 = vmatpush2.msra.mxu0 0.0
    %1343 = vmatprep.subr.mxu0 0.0
    %1344 = vmatpush2.msra.mxu0 0.0
    %1345 = vmatprep.subr.mxu0 0.0
    %1346 = vmatpush2.msra.mxu0 0.0
    %1347 = vmatprep.subr.mxu0 0.0
    %1348 = vmatpush2.msra.mxu0 0.0
    %1349 = vmatprep.subr.mxu0 0.0
    %1350 = vmatpush2.msra.mxu0 0.0
    %1351 = vmatprep.subr.mxu0 0.0
    %1352 = vmatpush2.msra.mxu0 0.0
    %1353 = vmatprep.subr.mxu0 0.0
    %1354 = vmatpush2.msra.mxu0 0.0
    %1355 = vmatprep.subr.mxu0 0.0
    %1356 = vmatpush2.msra.mxu0 0.0
    %1357 = vmatprep.subr.mxu0 0.0
    %1358 = vmatpush2.msra.mxu0 0.0
    %1359 = vmatprep.mubr.f32.mxu0 0.0
    %1360 = vmatmul.mubr.f32.gmra.mxu0 %v1293
    %v1361 = vpop.f32.mrf.mxu0
    %v1362 = vadd.f32 0.0, %v1361
    %v1363 = vpop.f32.mrf.mxu0
    %1364 = vdwg.mxu0
    %1365 = vrot.lane.b32.xlu0 %v167, 64
    %v1366 = vpop.permute.xlu0 %1365
    %v1369 = vsel %vm170, %v832, 0
    %1371 = vmatprep.subr.mxu0 0.0
    %1372 = vmatpush1.msra.mxu0 0.0
    %1373 = vmatprep.subr.mxu0 0.0
    %1374 = vmatpush1.msra.mxu0 0.0
    %1375 = vmatprep.subr.mxu0 0.0
    %1376 = vmatpush1.msra.mxu0 0.0
    %1377 = vmatprep.subr.mxu0 0.0
    %1378 = vmatpush1.msra.mxu0 0.0
    %1379 = vmatprep.subr.mxu0 0.0
    %1380 = vmatpush1.msra.mxu0 0.0
    %1381 = vmatprep.subr.mxu0 0.0
    %1382 = vmatpush1.msra.mxu0 0.0
    %1383 = vmatprep.subr.mxu0 0.0
    %1384 = vmatpush1.msra.mxu0 0.0
    %1385 = vmatprep.subr.mxu0 0.0
    %1386 = vmatpush1.msra.mxu0 0.0
    %1387 = vmatprep.subr.mxu0 0.0
    %1388 = vmatpush1.msra.mxu0 0.0
    %1389 = vmatprep.subr.mxu0 0.0
    %1390 = vmatpush1.msra.mxu0 0.0
    %1391 = vmatprep.subr.mxu0 0.0
    %1392 = vmatpush1.msra.mxu0 0.0
    %1393 = vmatprep.subr.mxu0 0.0
    %1394 = vmatpush1.msra.mxu0 0.0
    %1395 = vmatprep.subr.mxu0 0.0
    %1396 = vmatpush1.msra.mxu0 0.0
    %1397 = vmatprep.subr.mxu0 0.0
    %1398 = vmatpush1.msra.mxu0 0.0
    %1399 = vmatprep.subr.mxu0 0.0
    %1400 = vmatpush1.msra.mxu0 0.0
    %1401 = vmatprep.subr.mxu0 0.0
    %1402 = vmatpush1.msra.mxu0 %v1366
    %1403 = vmatprep.subr.mxu0 0.0
    %1404 = vmatpush2.msra.mxu0 0.0
    %1405 = vmatprep.subr.mxu0 0.0
    %1406 = vmatpush2.msra.mxu0 0.0
    %1407 = vmatprep.subr.mxu0 0.0
    %1408 = vmatpush2.msra.mxu0 0.0
    %1409 = vmatprep.subr.mxu0 0.0
    %1410 = vmatpush2.msra.mxu0 0.0
    %1411 = vmatprep.subr.mxu0 0.0
    %1412 = vmatpush2.msra.mxu0 0.0
    %1413 = vmatprep.subr.mxu0 0.0
    %1414 = vmatpush2.msra.mxu0 0.0
    %1415 = vmatprep.subr.mxu0 0.0
    %1416 = vmatpush2.msra.mxu0 0.0
    %1417 = vmatprep.subr.mxu0 0.0
    %1418 = vmatpush2.msra.mxu0 0.0
    %1419 = vmatprep.subr.mxu0 0.0
    %1420 = vmatpush2.msra.mxu0 0.0
    %1421 = vmatprep.subr.mxu0 0.0
    %1422 = vmatpush2.msra.mxu0 0.0
    %1423 = vmatprep.subr.mxu0 0.0
    %1424 = vmatpush2.msra.mxu0 0.0
    %1425 = vmatprep.subr.mxu0 0.0
    %1426 = vmatpush2.msra.mxu0 0.0
    %1427 = vmatprep.subr.mxu0 0.0
    %1428 = vmatpush2.msra.mxu0 0.0
    %1429 = vmatprep.subr.mxu0 0.0
    %1430 = vmatpush2.msra.mxu0 0.0
    %1431 = vmatprep.subr.mxu0 0.0
    %1432 = vmatpush2.msra.mxu0 0.0
    %1433 = vmatprep.subr.mxu0 0.0
    %1434 = vmatpush2.msra.mxu0 0.0
    %1435 = vmatprep.mubr.f32.mxu0 0.0
    %1436 = vmatmul.mubr.f32.gmra.mxu0 %v1369
    %v1437 = vpop.f32.mrf.mxu0
    %v1438 = vadd.f32 0.0, %v1437
    %v1439 = vpop.f32.mrf.mxu0
    %1440 = vdwg.mxu0
    %v1441 = vsel %vm170, %v818, 0.0
    %1442 = vadd.xlane.f32.xlu0 %v1441
    %v1443 = vpop.xlane.xlu0 %1442
    %v1444 = vsel %vm170, %v820, 0.0
    %1445 = vadd.xlane.f32.xlu0 %v1444
    %v1446 = vpop.xlane.xlu0 %1445
    %v1447 = vsel %vm170, %v822, 0.0
    %1448 = vadd.xlane.f32.xlu0 %v1447
    %v1449 = vpop.xlane.xlu0 %1448
    %v1450 = vsel %vm170, %v824, 0.0
    %1451 = vadd.xlane.f32.xlu0 %v1450
    %v1452 = vpop.xlane.xlu0 %1451
    %v1453 = vsel %vm170, %v826, 0.0
    %1454 = vadd.xlane.f32.xlu0 %v1453
    %v1455 = vpop.xlane.xlu0 %1454
    %v1456 = vsel %vm170, %v828, 0.0
    %1457 = vadd.xlane.f32.xlu0 %v1456
    %v1458 = vpop.xlane.xlu0 %1457
    %v1459 = vsel %vm170, %v830, 0.0
    %1460 = vadd.xlane.f32.xlu0 %v1459
    %v1461 = vpop.xlane.xlu0 %1460
    %v1462 = vsel %vm170, %v832, 0.0
    %1463 = vadd.xlane.f32.xlu0 %v1462
    %v1464 = vpop.xlane.xlu0 %1463
    %v1465 = vrcp.pop %v1443
    %v1466 = vmul.f32 %v906, %v1465
    %v1467 = vrcp.pop %v1446
    %v1468 = vmul.f32 %v982, %v1467
    %v1469 = vrcp.pop %v1449
    %v1470 = vmul.f32 %v1058, %v1469
    %v1471 = vrcp.pop %v1452
    %v1472 = vmul.f32 %v1134, %v1471
    %v1473 = vrcp.pop %v1455
    %v1474 = vmul.f32 %v1210, %v1473
    %v1475 = vrcp.pop %v1458
    %v1476 = vmul.f32 %v1286, %v1475
    %v1477 = vrcp.pop %v1461
    %v1478 = vmul.f32 %v1362, %v1477
    %v1479 = vrcp.pop %v1464
    %v1480 = vmul.f32 %v1438, %v1479
    %1483 = vrot.lane.b32.xlu0 %v1470, 8
    %v1484 = vpop.permute.xlu0 %1483
    %1485 = vrot.lane.b32.xlu0 %v1472, 8
    %v1486 = vpop.permute.xlu0 %1485
    %1491 = vrot.lane.b32.xlu0 %v1474, 16
    %v1492 = vpop.permute.xlu0 %1491
    %1493 = vrot.lane.b32.xlu0 %v1476, 16
    %v1494 = vpop.permute.xlu0 %1493
    %1499 = vrot.lane.b32.xlu0 %v1478, 24
    %v1500 = vpop.permute.xlu0 %1499
    %1501 = vrot.lane.b32.xlu0 %v1480, 24
    %v1502 = vpop.permute.xlu0 %1501
    %v1505 = vsel %vm170, %v1466, %v1484
    %v1506 = vsel %vm170, %v1468, %v1486
    %vm1507 = vcmask 130048
    %v1508 = vsel %vm1507, %v1505, %v1492
    %v1509 = vsel %vm1507, %v1506, %v1494
    %vm1510 = vcmask 195584
    %v1511 = vsel %vm1510, %v1508, %v1500
    %v1512 = vsel %vm1510, %v1509, %v1502
    %v1513 = vld [vmem:[#allocation7] sm:$0xff]
    %v1514 = vld [vmem:[#allocation7 + $0x8] sm:$0xff]
    %v1515 = vld [vmem:[#allocation7 + $0x10] sm:$0xff]
    %v1516 = vld [vmem:[#allocation7 + $0x18] sm:$0xff]
    %v1517 = vld [vmem:[%s2] sm:$0x1]
    %v1519 = vlaneseq
    %v1520 = vshrl.u32 %v1519, 7
    %v1521 = vsub.s32 0, %v1520
    %v1522 = vrot.slane %v1517, %v1521
    %1523 = vrot.lane.b32.xlu0 %v1522, 32
    %v1524 = vpop.permute.xlu0 %1523
    %v1527 = vsel %vm72, %v1511, 0
    %v1530 = vsel %vm72, %v1512, 0
    %1532 = vmatprep.subr.mxu0 0.0
    %1533 = vmatpush1.msra.mxu0 0.0
    %1534 = vmatprep.subr.mxu0 0.0
    %1535 = vmatpush1.msra.mxu0 0.0
    %1536 = vmatprep.subr.mxu0 0.0
    %1537 = vmatpush1.msra.mxu0 0.0
    %1538 = vmatprep.subr.mxu0 0.0
    %1539 = vmatpush1.msra.mxu0 0.0
    %1540 = vmatprep.subr.mxu0 0.0
    %1541 = vmatpush1.msra.mxu0 0.0
    %1542 = vmatprep.subr.mxu0 0.0
    %1543 = vmatpush1.msra.mxu0 0.0
    %1544 = vmatprep.subr.mxu0 0.0
    %1545 = vmatpush1.msra.mxu0 0.0
    %1546 = vmatprep.subr.mxu0 0.0
    %1547 = vmatpush1.msra.mxu0 0.0
    %1548 = vmatprep.subr.mxu0 0.0
    %1549 = vmatpush1.msra.mxu0 0.0
    %1550 = vmatprep.subr.mxu0 0.0
    %1551 = vmatpush1.msra.mxu0 0.0
    %1552 = vmatprep.subr.mxu0 0.0
    %1553 = vmatpush1.msra.mxu0 0.0
    %1554 = vmatprep.subr.mxu0 0.0
    %1555 = vmatpush1.msra.mxu0 0.0
    %1556 = vmatprep.subr.mxu0 0.0
    %1557 = vmatpush1.msra.mxu0 %v1516
    %1558 = vmatprep.subr.mxu0 0.0
    %1559 = vmatpush1.msra.mxu0 %v1515
    %1560 = vmatprep.subr.mxu0 0.0
    %1561 = vmatpush1.msra.mxu0 %v1514
    %1562 = vmatprep.subr.mxu0 0.0
    %1563 = vmatpush1.msra.mxu0 %v1513
    %1564 = vmatprep.subr.mxu0 0.0
    %1565 = vmatpush2.msra.mxu0 0.0
    %1566 = vmatprep.subr.mxu0 0.0
    %1567 = vmatpush2.msra.mxu0 0.0
    %1568 = vmatprep.subr.mxu0 0.0
    %1569 = vmatpush2.msra.mxu0 0.0
    %1570 = vmatprep.subr.mxu0 0.0
    %1571 = vmatpush2.msra.mxu0 0.0
    %1572 = vmatprep.subr.mxu0 0.0
    %1573 = vmatpush2.msra.mxu0 0.0
    %1574 = vmatprep.subr.mxu0 0.0
    %1575 = vmatpush2.msra.mxu0 0.0
    %1576 = vmatprep.subr.mxu0 0.0
    %1577 = vmatpush2.msra.mxu0 0.0
    %1578 = vmatprep.subr.mxu0 0.0
    %1579 = vmatpush2.msra.mxu0 0.0
    %1580 = vmatprep.subr.mxu0 0.0
    %1581 = vmatpush2.msra.mxu0 0.0
    %1582 = vmatprep.subr.mxu0 0.0
    %1583 = vmatpush2.msra.mxu0 0.0
    %1584 = vmatprep.subr.mxu0 0.0
    %1585 = vmatpush2.msra.mxu0 0.0
    %1586 = vmatprep.subr.mxu0 0.0
    %1587 = vmatpush2.msra.mxu0 0.0
    %1588 = vmatprep.subr.mxu0 0.0
    %1589 = vmatpush2.msra.mxu0 0.0
    %1590 = vmatprep.subr.mxu0 0.0
    %1591 = vmatpush2.msra.mxu0 0.0
    %1592 = vmatprep.subr.mxu0 0.0
    %1593 = vmatpush2.msra.mxu0 0.0
    %1594 = vmatprep.subr.mxu0 0.0
    %1595 = vmatpush2.msra.mxu0 0.0
    %1596 = vmatprep.mubr.f32.mxu0 0.0
    %1597 = vmatmul.mubr.f32.gmra.mxu0 %v1527
    %v1598 = vpop.f32.mrf.mxu0
    %v1599 = vadd.f32 %v1524, %v1598
    %v1600 = vpop.f32.mrf.mxu0
    %1601 = vmatprep.mubr.f32.mxu0 0.0
    %1602 = vmatmul.mubr.f32.gmra.mxu0 %v1530
    %v1603 = vpop.f32.mrf.mxu0
    %v1604 = vadd.f32 %v1524, %v1603
    %v1605 = vpop.f32.mrf.mxu0
    %1606 = vdwg.mxu0
    %1607 = vst.msk [vmem:[#allocation8] sm:$0xff] %vm72, %v1599
    %1608 = vst.msk [vmem:[#allocation8 + $0x8] sm:$0xff] %vm72, %v1604
    // Predicated region
    $region30: #{tpu_custom_call.1} parent=1 // pred_check
      _
    $region31: #{tpu_custom_call.1} parent=1 // pred_check_branch
      %1610 = sbr.rel (0) target = $region33
    $region32: #{tpu_custom_call.1} parent=1 // pred_region
      %s1612 = ssub.s32 256, 256
      %1613 = vsyncadd [#allocation4], %s1612
      %s1614 = sshll.u32 [#allocation8], 4
      %s1615 = int_to_ptr.vmem [resolvable:$true] %s1614
      %1620 = dma.vmem_to_hbm [thread:$0]  %s1615, 256, %s4, [#allocation4], 128, 128, 8
    $region33: #{tpu_custom_call.1} parent=1 // pred_fallthru
      _
    // Predicated region
    $region34: #{tpu_custom_call.1} parent=1 // pred_check
      _
    $region35: #{tpu_custom_call.1} parent=1 // pred_check_branch
      %1622 = sbr.rel (0) target = $region37
    $region36: #{tpu_custom_call.1} parent=1 // pred_region
      %1623 = dma.done [#allocation4], 256
    $region37: #{tpu_custom_call.1} parent=1 // pred_fallthru
      _
    %1624 = vsyncpa [#allocation3], 1
    %1625 = vsyncpa [#allocation6], 1
    %1626 = vsyncpa [#allocation4], 1

</llo_original>
